<compile_context>
chip_gen: v6e
topology: v6e:2x2x1
jax: 0.10.0
libtpu: 0.0.40
codegen_flags: <defaults>
</compile_context>

<pallas_src>
import functools
import math

import jax
import jax.numpy as jnp
from jax.experimental import pallas as pl
from jax.experimental.pallas import tpu as pltpu


# ----------------------------------------------------------------------------
# Fused kernel: conv(3x3,s1)+ReLU -> FC+ReLU -> LSTMCell -> relu(h')
# One batch tile per grid step; batch is the M dimension of all matmuls.
# ----------------------------------------------------------------------------
def _fused_kernel(patch_ref, wbd_ref, bconv_ref, wfc_ref, bfc_ref,
                  wl_ref, bl_ref, hx_ref, cx_ref, out_ref):
    # patch_ref: (B, NG, GK)   bf16 im2col patches, grouped per 128-lane block
    # wbd_ref  : (GK, 128)     bf16 block-diagonal conv weight
    # bconv_ref: (1, 128)      f32 conv bias tiled across the lane group
    # wfc_ref  : (NG, 128, D)  bf16 FC weight per lane group (torch CHW order folded in)
    # bfc_ref  : (1, D)        f32
    # wl_ref   : (D+HID, 4H)   bf16 fused [Wih^T | Whh^T]
    # bl_ref   : (1, 4H)       f32 (b_ih + b_hh)
    # hx_ref/cx_ref: (B, HID)  f32 previous hidden / cell state
    # out_ref  : (B, OUT_W)    f32 packed [relu(h') | h' | c' | pad]
    B, NG, GK = patch_ref.shape
    GL = wbd_ref.shape[1]                       # 128
    D = bfc_ref.shape[-1]
    HID = hx_ref.shape[-1]
    PAD_OUT = out_ref.shape[-1] - 3 * HID

    # ---- Conv2d + bias + ReLU: ONE block-diagonal MXU matmul ----------------
    patches = patch_ref[...].reshape(B * NG, GK)          # leading-dim collapse (free)
    conv = jnp.dot(patches, wbd_ref[...],
                   preferred_element_type=jnp.float32)    # (B*NG, 128), lane-dense
    conv = jnp.maximum(conv + bconv_ref[...], 0.0)
    conv = conv.reshape(B, NG, GL)                        # leading-dim split (free)

    # ---- Linear(C*H*W -> D) + ReLU: accumulate over the NG lane groups ------
    feat = jnp.zeros((B, D), jnp.float32)
    for j in range(NG):
        feat = feat + jnp.dot(conv[:, j, :].astype(jnp.bfloat16), wfc_ref[j],
                              preferred_element_type=jnp.float32)
    feat = jnp.maximum(feat + bfc_ref[...], 0.0)          # (B, D) f32

    # ---- LSTMCell (torch gate order i, f, g, o) + output gate relu ----------
    hx = hx_ref[...]
    cx = cx_ref[...]
    zin = jnp.concatenate([feat, hx], axis=-1).astype(jnp.bfloat16)   # (B, D+HID)
    gates = (jnp.dot(zin, wl_ref[...], preferred_element_type=jnp.float32)
             + bl_ref[...])                                # (B, 4*HID) f32

    def _sigmoid(v):
        return 1.0 / (1.0 + jnp.exp(-v))

    i_g = _sigmoid(gates[:, 0 * HID:1 * HID])
    f_g = _sigmoid(gates[:, 1 * HID:2 * HID])
    g_g = jnp.tanh(gates[:, 2 * HID:3 * HID])
    o_g = _sigmoid(gates[:, 3 * HID:4 * HID])
    c_new = f_g * cx + i_g * g_g
    h_new = o_g * jnp.tanh(c_new)
    y = jnp.maximum(h_new, 0.0)                            # gate = F.relu

    pieces = [y, h_new, c_new]
    if PAD_OUT:
        pieces.append(jnp.zeros((B, PAD_OUT), jnp.float32))
    out_ref[...] = jnp.concatenate(pieces, axis=-1)        # one 128-lane-dense store


# ----------------------------------------------------------------------------
# Wrapper: trace-time im2col / weight layout prep + the single pallas_call.
# ----------------------------------------------------------------------------
def conv_lstm_forward(x_nchw, w_conv, b_conv, w_fc, b_fc,
                      w_ih, w_hh, b_ih, b_hh, hx, cx, *, padding):
    N, Cin, H, W = x_nchw.shape
    Cout, _, KH, KW = w_conv.shape
    Ho = (H - KH + 2 * padding) + 1                        # stride == 1
    Wo = (W - KW + 2 * padding) + 1
    P = Ho * Wo
    D = w_fc.shape[1]
    Hid = w_hh.shape[1]
    Kdim = KH * KW * Cin

    assert 128 % Cout == 0, "conv out-channels must divide the 128-lane width"
    G = 128 // Cout                    # spatial positions packed per 128-lane group
    assert P % G == 0, "spatial positions must tile into 128-lane groups"
    NG = P // G                        # number of lane groups per image
    GK = G * Kdim                      # im2col width per lane group
    GL = G * Cout                      # = 128
    OUT_W = -(-3 * Hid // 128) * 128   # packed [y | h' | c' | pad] lane width

    # Batch tiling: batch is the MXU M dimension inside the kernel.
    B_TILE = 8 if N >= 8 else N
    N_pad = -(-N // B_TILE) * B_TILE

    # --- trace-time glue (tiny tensors / weights, done once per jit) --------
    x_nhwc = jnp.transpose(x_nchw, (0, 2, 3, 1))
    x_pad = jnp.pad(x_nhwc, ((0, 0), (padding, padding),
                             (padding, padding), (0, 0)))
    taps = [x_pad[:, kh:kh + Ho, kw:kw + Wo, :]
            for kh in range(KH) for kw in range(KW)]
    patches = jnp.stack(taps, axis=3).reshape(N, P, Kdim)  # kidx = (kh*KW+kw)*Cin+ci
    patches = patches.reshape(N, NG, GK)                   # q = p_local*Kdim + kidx
    if N_pad > N:
        patches = jnp.pad(patches, ((0, N_pad - N), (0, 0), (0, 0)))
    patches = patches.astype(jnp.bfloat16)

    # Block-diagonal conv weight: G copies of (Kdim, Cout) on the diagonal, so
    # one (B*NG, GK) x (GK, 128) matmul yields all positions/channels lane-dense.
    wc_flat = jnp.transpose(w_conv, (2, 3, 1, 0)).reshape(Kdim, Cout)
    wbd = jnp.kron(jnp.eye(G, dtype=jnp.float32), wc_flat).astype(jnp.bfloat16)
    bconv = jnp.tile(b_conv, (G,)).reshape(1, GL)          # bias per lane, f32

    # FC weight: torch flatten order is (C, H, W) -> row c*P + p; the kernel's
    # conv feature order is p*Cout + c.  Fold the permutation into the weight
    # and group it per 128-lane block: wfc[ng, p_loc*Cout + c, d].
    wfc = (w_fc.reshape(Cout, P, D).transpose(1, 0, 2)
           .reshape(NG, GL, D).astype(jnp.bfloat16))
    bfc = b_fc.reshape(1, D)

    # LSTMCell: fused weight so gates = [feat | hx] @ wl + (b_ih + b_hh).
    wl = jnp.concatenate([w_ih.T, w_hh.T], axis=0).astype(jnp.bfloat16)
    bl = (b_ih + b_hh).reshape(1, 4 * Hid)

    # LSTMBody semantics: a (1, Hid) reset state is replicated across the batch.
    if hx.shape[0] == 1 and N > 1:
        hx = jnp.broadcast_to(hx, (N, Hid))
        cx = jnp.broadcast_to(cx, (N, Hid))
    if N_pad > N:
        hx = jnp.pad(hx, ((0, N_pad - N), (0, 0)))
        cx = jnp.pad(cx, ((0, N_pad - N), (0, 0)))

    flops = int(2 * N_pad * NG * GK * GL           # block-diag conv matmul
                + 2 * N_pad * NG * GL * D          # FC group matmuls
                + 2 * N_pad * (D + Hid) * 4 * Hid)  # LSTM gates matmul
    bytes_accessed = int(N_pad * NG * GK * 2 + GK * GL * 2 + NG * GL * D * 2
                         + (D + Hid) * 4 * Hid * 2 + (GL + D + 4 * Hid) * 4
                         + 2 * N_pad * Hid * 4 + N_pad * OUT_W * 4)
    cost = pl.CostEstimate(flops=flops, transcendentals=int(5 * N_pad * Hid),
                           bytes_accessed=bytes_accessed)

    packed = pl.pallas_call(
        _fused_kernel,
        out_shape=jax.ShapeDtypeStruct((N_pad, OUT_W), jnp.float32),
        grid=(N_pad // B_TILE,),
        in_specs=[
            pl.BlockSpec((B_TILE, NG, GK), lambda n: (n, 0, 0)),   # patches
            pl.BlockSpec((GK, GL), lambda n: (0, 0)),              # wbd (resident)
            pl.BlockSpec((1, GL), lambda n: (0, 0)),               # bconv
            pl.BlockSpec((NG, GL, D), lambda n: (0, 0, 0)),        # wfc (resident)
            pl.BlockSpec((1, D), lambda n: (0, 0)),                # bfc
            pl.BlockSpec((D + Hid, 4 * Hid), lambda n: (0, 0)),    # wl (resident)
            pl.BlockSpec((1, 4 * Hid), lambda n: (0, 0)),          # bl
            pl.BlockSpec((B_TILE, Hid), lambda n: (n, 0)),         # hx
            pl.BlockSpec((B_TILE, Hid), lambda n: (n, 0)),         # cx
        ],
        out_specs=pl.BlockSpec((B_TILE, OUT_W), lambda n: (n, 0)),
        compiler_params=pltpu.CompilerParams(dimension_semantics=("parallel",)),
        cost_estimate=cost,
    )(patches, wbd, bconv, wfc, bfc, wl, bl, hx, cx)

    y = packed[:N, 0 * Hid:1 * Hid]
    h_new = packed[:N, 1 * Hid:2 * Hid]
    c_new = packed[:N, 2 * Hid:3 * Hid]
    return y, h_new, c_new


# ----------------------------------------------------------------------------
# Pure-JAX reference of the PyTorch forward, for verification.
# ----------------------------------------------------------------------------
def reference_forward(x, w_conv, b_conv, w_fc, b_fc,
                      w_ih, w_hh, b_ih, b_hh, hx, cx, padding):
    N = x.shape[0]
    Hid = w_hh.shape[1]
    y = jax.lax.conv_general_dilated(
        x, w_conv, window_strides=(1, 1),
        padding=[(padding, padding), (padding, padding)],
        dimension_numbers=("NCHW", "OIHW", "NCHW"),
        precision=jax.lax.Precision.HIGHEST)
    y = jnp.maximum(y + b_conv[None, :, None, None], 0.0)
    feat = y.reshape(N, -1)
    feat = jnp.maximum(
        jnp.dot(feat, w_fc, precision=jax.lax.Precision.HIGHEST) + b_fc, 0.0)
    if hx.shape[0] == 1 and N > 1:
        hx = jnp.broadcast_to(hx, (N, Hid))
        cx = jnp.broadcast_to(cx, (N, Hid))
    gates = (jnp.dot(feat, w_ih.T, precision=jax.lax.Precision.HIGHEST) + b_ih
             + jnp.dot(hx, w_hh.T, precision=jax.lax.Precision.HIGHEST) + b_hh)
    i_g, f_g, g_g, o_g = jnp.split(gates, 4, axis=-1)
    sig = lambda v: 1.0 / (1.0 + jnp.exp(-v))
    c_new = sig(f_g) * cx + sig(i_g) * jnp.tanh(g_g)
    h_new = sig(o_g) * jnp.tanh(c_new)
    return jnp.maximum(h_new, 0.0), h_new, c_new


if __name__ == "__main__":
    # Small deterministic config consistent with the module.
    N, Cin, H, W = 2, 4, 16, 16
    Cout, K, PAD = 8, 3, 1
    feature_dim = 32
    hidden = 32
    Ho = (H - K + 2 * PAD) + 1
    F_in = Cout * Ho * Ho

    key = jax.random.PRNGKey(0)
    ks = jax.random.split(key, 11)

    # Deterministic synthetic parameters (layer_init uses orthogonal*sqrt(2);
    # scaled gaussians keep the same shapes/magnitudes, which is what matters).
    w_conv = (jax.random.normal(ks[0], (Cout, Cin, K, K), jnp.float32)
              * (math.sqrt(2.0) / math.sqrt(Cin * K * K)))
    b_conv = 0.1 * jax.random.normal(ks[1], (Cout,), jnp.float32)
    w_fc = (jax.random.normal(ks[2], (F_in, feature_dim), jnp.float32)
            * (math.sqrt(2.0) / math.sqrt(F_in)))
    b_fc = 0.1 * jax.random.normal(ks[3], (feature_dim,), jnp.float32)
    # LSTMCell parameters in torch layout: weight_ih (4H, in), weight_hh (4H, H)
    w_ih = (jax.random.normal(ks[4], (4 * hidden, feature_dim), jnp.float32)
            / math.sqrt(hidden))
    w_hh = (jax.random.normal(ks[5], (4 * hidden, hidden), jnp.float32)
            / math.sqrt(hidden))
    b_ih = 0.1 * jax.random.normal(ks[6], (4 * hidden,), jnp.float32)
    b_hh = 0.1 * jax.random.normal(ks[7], (4 * hidden,), jnp.float32)

    x = jax.random.normal(ks[8], (N, Cin, H, W), jnp.float32)
    # reset-style recurrent state (repeat=1); replicated across the batch inside
    # the wrapper, mirroring LSTMBody.forward's torch.cat behavior.
    hx = 0.5 * jax.random.normal(ks[9], (1, hidden), jnp.float32)
    cx = 0.5 * jax.random.normal(ks[10], (1, hidden), jnp.float32)

    fwd = jax.jit(functools.partial(conv_lstm_forward, padding=PAD))
    y, h_new, c_new = fwd(x, w_conv, b_conv, w_fc, b_fc,
                          w_ih, w_hh, b_ih, b_hh, hx, cx)
    y = jax.block_until_ready(y)

    y_ref, h_ref, c_ref = reference_forward(x, w_conv, b_conv, w_fc, b_fc,
                                            w_ih, w_hh, b_ih, b_hh, hx, cx, PAD)
    assert y.shape == (N, hidden), y.shape
    assert h_new.shape == (N, hidden) and c_new.shape == (N, hidden)
    # bf16 operands with f32 accumulation vs. a HIGHEST-precision f32 reference.
    for got, ref, name in ((y, y_ref, "x_out"), (h_new, h_ref, "hidden"),
                           (c_new, c_ref, "cell")):
        err = float(jnp.max(jnp.abs(got - ref)))
        assert jnp.allclose(got, ref, atol=1e-2, rtol=1e-2), (name, err)

    print("KERNEL_OK")
</pallas_src>

<mosaic_0001>
module attributes {stable_mosaic.version = 11 : i64} {
  func.func @_fused_kernel(%arg0: i32, %arg1: memref<2x16x576xbf16, #tpu.memory_space<vmem>>, %arg2: memref<576x128xbf16, #tpu.memory_space<vmem>>, %arg3: memref<1x128xf32, #tpu.memory_space<vmem>>, %arg4: memref<16x128x32xbf16, #tpu.memory_space<vmem>>, %arg5: memref<1x32xf32, #tpu.memory_space<vmem>>, %arg6: memref<64x128xbf16, #tpu.memory_space<vmem>>, %arg7: memref<1x128xf32, #tpu.memory_space<vmem>>, %arg8: memref<2x32xf32, #tpu.memory_space<vmem>>, %arg9: memref<2x32xf32, #tpu.memory_space<vmem>>, %arg10: memref<2x128xf32, #tpu.memory_space<vmem>>) attributes {dimension_semantics = [#tpu.dimension_semantics<parallel>], iteration_bounds = array<i64: 1>, scalar_prefetch = 0 : i64, scratch_operands = 0 : i64, tpu.core_type = #tpu.core_type<tc>, window_params = [{transform_indices = @transform_0, window_bounds = array<i64: 2, 16, 576>}, {pipeline_mode = #tpu.pipeline_mode<synchronous>, transform_indices = @transform_1, window_bounds = array<i64: 576, 128>}, {pipeline_mode = #tpu.pipeline_mode<synchronous>, transform_indices = @transform_2, window_bounds = array<i64: 1, 128>}, {pipeline_mode = #tpu.pipeline_mode<synchronous>, transform_indices = @transform_3, window_bounds = array<i64: 16, 128, 32>}, {pipeline_mode = #tpu.pipeline_mode<synchronous>, transform_indices = @transform_4, window_bounds = array<i64: 1, 32>}, {pipeline_mode = #tpu.pipeline_mode<synchronous>, transform_indices = @transform_5, window_bounds = array<i64: 64, 128>}, {pipeline_mode = #tpu.pipeline_mode<synchronous>, transform_indices = @transform_6, window_bounds = array<i64: 1, 128>}, {transform_indices = @transform_7, window_bounds = array<i64: 2, 32>}, {transform_indices = @transform_8, window_bounds = array<i64: 2, 32>}, {transform_indices = @transform_9, window_bounds = array<i64: 2, 128>}]} {
    %c0 = arith.constant 0 : index
    %c0_0 = arith.constant 0 : index
    %c0_1 = arith.constant 0 : index
    %0 = vector.load %arg1[%c0, %c0_0, %c0_1] : memref<2x16x576xbf16, #tpu.memory_space<vmem>>, vector<2x16x576xbf16>
    %1 = vector.shape_cast %0 : vector<2x16x576xbf16> to vector<32x576xbf16>
    %c0_2 = arith.constant 0 : index
    %c0_3 = arith.constant 0 : index
    %2 = vector.load %arg2[%c0_2, %c0_3] : memref<576x128xbf16, #tpu.memory_space<vmem>>, vector<576x128xbf16>
    %cst = arith.constant dense<0.000000e+00> : vector<32x128xf32>
    %3 = tpu.matmul %1, %2, %cst {dimension_numbers = #tpu.dot_dimension_numbers<[1], [0], [0], [1], [0, 0, 1, 1], [], []>} : vector<32x576xbf16>, vector<576x128xbf16>, vector<32x128xf32> -> vector<32x128xf32>
    %c0_4 = arith.constant 0 : index
    %c0_5 = arith.constant 0 : index
    %4 = vector.load %arg3[%c0_4, %c0_5] : memref<1x128xf32, #tpu.memory_space<vmem>>, vector<1x128xf32>
    %5 = vector.broadcast %4 : vector<1x128xf32> to vector<32x128xf32>
    %6 = arith.addf %3, %5 : vector<32x128xf32>
    %cst_6 = arith.constant 0.000000e+00 : f32
    %7 = vector.broadcast %cst_6 : f32 to vector<32x128xf32>
    %8 = arith.maximumf %6, %7 : vector<32x128xf32>
    %9 = vector.shape_cast %8 : vector<32x128xf32> to vector<2x16x128xf32>
    %cst_7 = arith.constant 0.000000e+00 : f32
    %10 = vector.broadcast %cst_7 : f32 to vector<2x32xf32>
    %11 = vector.extract_strided_slice %9 {offsets = [0, 0, 0], sizes = [2, 1, 128], strides = [1, 1, 1]} : vector<2x16x128xf32> to vector<2x1x128xf32>
    %12 = vector.shape_cast %11 : vector<2x1x128xf32> to vector<2x128xf32>
    %13 = arith.truncf %12 : vector<2x128xf32> to vector<2x128xbf16>
    %c0_8 = arith.constant 0 : index
    %c0_9 = arith.constant 0 : index
    %c0_10 = arith.constant 0 : index
    %14 = vector.load %arg4[%c0_8, %c0_9, %c0_10] : memref<16x128x32xbf16, #tpu.memory_space<vmem>>, vector<1x128x32xbf16>
    %15 = vector.shape_cast %14 : vector<1x128x32xbf16> to vector<128x32xbf16>
    %cst_11 = arith.constant dense<0.000000e+00> : vector<2x32xf32>
    %16 = tpu.matmul %13, %15, %cst_11 {dimension_numbers = #tpu.dot_dimension_numbers<[1], [0], [0], [1], [0, 0, 1, 1], [], []>} : vector<2x128xbf16>, vector<128x32xbf16>, vector<2x32xf32> -> vector<2x32xf32>
    %17 = arith.addf %10, %16 : vector<2x32xf32>
    %18 = vector.extract_strided_slice %9 {offsets = [0, 1, 0], sizes = [2, 1, 128], strides = [1, 1, 1]} : vector<2x16x128xf32> to vector<2x1x128xf32>
    %19 = vector.shape_cast %18 : vector<2x1x128xf32> to vector<2x128xf32>
    %20 = arith.truncf %19 : vector<2x128xf32> to vector<2x128xbf16>
    %c1 = arith.constant 1 : index
    %c0_12 = arith.constant 0 : index
    %c0_13 = arith.constant 0 : index
    %21 = vector.load %arg4[%c1, %c0_12, %c0_13] : memref<16x128x32xbf16, #tpu.memory_space<vmem>>, vector<1x128x32xbf16>
    %22 = vector.shape_cast %21 : vector<1x128x32xbf16> to vector<128x32xbf16>
    %cst_14 = arith.constant dense<0.000000e+00> : vector<2x32xf32>
    %23 = tpu.matmul %20, %22, %cst_14 {dimension_numbers = #tpu.dot_dimension_numbers<[1], [0], [0], [1], [0, 0, 1, 1], [], []>} : vector<2x128xbf16>, vector<128x32xbf16>, vector<2x32xf32> -> vector<2x32xf32>
    %24 = arith.addf %17, %23 : vector<2x32xf32>
    %25 = vector.extract_strided_slice %9 {offsets = [0, 2, 0], sizes = [2, 1, 128], strides = [1, 1, 1]} : vector<2x16x128xf32> to vector<2x1x128xf32>
    %26 = vector.shape_cast %25 : vector<2x1x128xf32> to vector<2x128xf32>
    %27 = arith.truncf %26 : vector<2x128xf32> to vector<2x128xbf16>
    %c2 = arith.constant 2 : index
    %c0_15 = arith.constant 0 : index
    %c0_16 = arith.constant 0 : index
    %28 = vector.load %arg4[%c2, %c0_15, %c0_16] : memref<16x128x32xbf16, #tpu.memory_space<vmem>>, vector<1x128x32xbf16>
    %29 = vector.shape_cast %28 : vector<1x128x32xbf16> to vector<128x32xbf16>
    %cst_17 = arith.constant dense<0.000000e+00> : vector<2x32xf32>
    %30 = tpu.matmul %27, %29, %cst_17 {dimension_numbers = #tpu.dot_dimension_numbers<[1], [0], [0], [1], [0, 0, 1, 1], [], []>} : vector<2x128xbf16>, vector<128x32xbf16>, vector<2x32xf32> -> vector<2x32xf32>
    %31 = arith.addf %24, %30 : vector<2x32xf32>
    %32 = vector.extract_strided_slice %9 {offsets = [0, 3, 0], sizes = [2, 1, 128], strides = [1, 1, 1]} : vector<2x16x128xf32> to vector<2x1x128xf32>
    %33 = vector.shape_cast %32 : vector<2x1x128xf32> to vector<2x128xf32>
    %34 = arith.truncf %33 : vector<2x128xf32> to vector<2x128xbf16>
    %c3 = arith.constant 3 : index
    %c0_18 = arith.constant 0 : index
    %c0_19 = arith.constant 0 : index
    %35 = vector.load %arg4[%c3, %c0_18, %c0_19] : memref<16x128x32xbf16, #tpu.memory_space<vmem>>, vector<1x128x32xbf16>
    %36 = vector.shape_cast %35 : vector<1x128x32xbf16> to vector<128x32xbf16>
    %cst_20 = arith.constant dense<0.000000e+00> : vector<2x32xf32>
    %37 = tpu.matmul %34, %36, %cst_20 {dimension_numbers = #tpu.dot_dimension_numbers<[1], [0], [0], [1], [0, 0, 1, 1], [], []>} : vector<2x128xbf16>, vector<128x32xbf16>, vector<2x32xf32> -> vector<2x32xf32>
    %38 = arith.addf %31, %37 : vector<2x32xf32>
    %39 = vector.extract_strided_slice %9 {offsets = [0, 4, 0], sizes = [2, 1, 128], strides = [1, 1, 1]} : vector<2x16x128xf32> to vector<2x1x128xf32>
    %40 = vector.shape_cast %39 : vector<2x1x128xf32> to vector<2x128xf32>
    %41 = arith.truncf %40 : vector<2x128xf32> to vector<2x128xbf16>
    %c4 = arith.constant 4 : index
    %c0_21 = arith.constant 0 : index
    %c0_22 = arith.constant 0 : index
    %42 = vector.load %arg4[%c4, %c0_21, %c0_22] : memref<16x128x32xbf16, #tpu.memory_space<vmem>>, vector<1x128x32xbf16>
    %43 = vector.shape_cast %42 : vector<1x128x32xbf16> to vector<128x32xbf16>
    %cst_23 = arith.constant dense<0.000000e+00> : vector<2x32xf32>
    %44 = tpu.matmul %41, %43, %cst_23 {dimension_numbers = #tpu.dot_dimension_numbers<[1], [0], [0], [1], [0, 0, 1, 1], [], []>} : vector<2x128xbf16>, vector<128x32xbf16>, vector<2x32xf32> -> vector<2x32xf32>
    %45 = arith.addf %38, %44 : vector<2x32xf32>
    %46 = vector.extract_strided_slice %9 {offsets = [0, 5, 0], sizes = [2, 1, 128], strides = [1, 1, 1]} : vector<2x16x128xf32> to vector<2x1x128xf32>
    %47 = vector.shape_cast %46 : vector<2x1x128xf32> to vector<2x128xf32>
    %48 = arith.truncf %47 : vector<2x128xf32> to vector<2x128xbf16>
    %c5 = arith.constant 5 : index
    %c0_24 = arith.constant 0 : index
    %c0_25 = arith.constant 0 : index
    %49 = vector.load %arg4[%c5, %c0_24, %c0_25] : memref<16x128x32xbf16, #tpu.memory_space<vmem>>, vector<1x128x32xbf16>
    %50 = vector.shape_cast %49 : vector<1x128x32xbf16> to vector<128x32xbf16>
    %cst_26 = arith.constant dense<0.000000e+00> : vector<2x32xf32>
    %51 = tpu.matmul %48, %50, %cst_26 {dimension_numbers = #tpu.dot_dimension_numbers<[1], [0], [0], [1], [0, 0, 1, 1], [], []>} : vector<2x128xbf16>, vector<128x32xbf16>, vector<2x32xf32> -> vector<2x32xf32>
    %52 = arith.addf %45, %51 : vector<2x32xf32>
    %53 = vector.extract_strided_slice %9 {offsets = [0, 6, 0], sizes = [2, 1, 128], strides = [1, 1, 1]} : vector<2x16x128xf32> to vector<2x1x128xf32>
    %54 = vector.shape_cast %53 : vector<2x1x128xf32> to vector<2x128xf32>
    %55 = arith.truncf %54 : vector<2x128xf32> to vector<2x128xbf16>
    %c6 = arith.constant 6 : index
    %c0_27 = arith.constant 0 : index
    %c0_28 = arith.constant 0 : index
    %56 = vector.load %arg4[%c6, %c0_27, %c0_28] : memref<16x128x32xbf16, #tpu.memory_space<vmem>>, vector<1x128x32xbf16>
    %57 = vector.shape_cast %56 : vector<1x128x32xbf16> to vector<128x32xbf16>
    %cst_29 = arith.constant dense<0.000000e+00> : vector<2x32xf32>
    %58 = tpu.matmul %55, %57, %cst_29 {dimension_numbers = #tpu.dot_dimension_numbers<[1], [0], [0], [1], [0, 0, 1, 1], [], []>} : vector<2x128xbf16>, vector<128x32xbf16>, vector<2x32xf32> -> vector<2x32xf32>
    %59 = arith.addf %52, %58 : vector<2x32xf32>
    %60 = vector.extract_strided_slice %9 {offsets = [0, 7, 0], sizes = [2, 1, 128], strides = [1, 1, 1]} : vector<2x16x128xf32> to vector<2x1x128xf32>
    %61 = vector.shape_cast %60 : vector<2x1x128xf32> to vector<2x128xf32>
    %62 = arith.truncf %61 : vector<2x128xf32> to vector<2x128xbf16>
    %c7 = arith.constant 7 : index
    %c0_30 = arith.constant 0 : index
    %c0_31 = arith.constant 0 : index
    %63 = vector.load %arg4[%c7, %c0_30, %c0_31] : memref<16x128x32xbf16, #tpu.memory_space<vmem>>, vector<1x128x32xbf16>
    %64 = vector.shape_cast %63 : vector<1x128x32xbf16> to vector<128x32xbf16>
    %cst_32 = arith.constant dense<0.000000e+00> : vector<2x32xf32>
    %65 = tpu.matmul %62, %64, %cst_32 {dimension_numbers = #tpu.dot_dimension_numbers<[1], [0], [0], [1], [0, 0, 1, 1], [], []>} : vector<2x128xbf16>, vector<128x32xbf16>, vector<2x32xf32> -> vector<2x32xf32>
    %66 = arith.addf %59, %65 : vector<2x32xf32>
    %67 = vector.extract_strided_slice %9 {offsets = [0, 8, 0], sizes = [2, 1, 128], strides = [1, 1, 1]} : vector<2x16x128xf32> to vector<2x1x128xf32>
    %68 = vector.shape_cast %67 : vector<2x1x128xf32> to vector<2x128xf32>
    %69 = arith.truncf %68 : vector<2x128xf32> to vector<2x128xbf16>
    %c8 = arith.constant 8 : index
    %c0_33 = arith.constant 0 : index
    %c0_34 = arith.constant 0 : index
    %70 = vector.load %arg4[%c8, %c0_33, %c0_34] : memref<16x128x32xbf16, #tpu.memory_space<vmem>>, vector<1x128x32xbf16>
    %71 = vector.shape_cast %70 : vector<1x128x32xbf16> to vector<128x32xbf16>
    %cst_35 = arith.constant dense<0.000000e+00> : vector<2x32xf32>
    %72 = tpu.matmul %69, %71, %cst_35 {dimension_numbers = #tpu.dot_dimension_numbers<[1], [0], [0], [1], [0, 0, 1, 1], [], []>} : vector<2x128xbf16>, vector<128x32xbf16>, vector<2x32xf32> -> vector<2x32xf32>
    %73 = arith.addf %66, %72 : vector<2x32xf32>
    %74 = vector.extract_strided_slice %9 {offsets = [0, 9, 0], sizes = [2, 1, 128], strides = [1, 1, 1]} : vector<2x16x128xf32> to vector<2x1x128xf32>
    %75 = vector.shape_cast %74 : vector<2x1x128xf32> to vector<2x128xf32>
    %76 = arith.truncf %75 : vector<2x128xf32> to vector<2x128xbf16>
    %c9 = arith.constant 9 : index
    %c0_36 = arith.constant 0 : index
    %c0_37 = arith.constant 0 : index
    %77 = vector.load %arg4[%c9, %c0_36, %c0_37] : memref<16x128x32xbf16, #tpu.memory_space<vmem>>, vector<1x128x32xbf16>
    %78 = vector.shape_cast %77 : vector<1x128x32xbf16> to vector<128x32xbf16>
    %cst_38 = arith.constant dense<0.000000e+00> : vector<2x32xf32>
    %79 = tpu.matmul %76, %78, %cst_38 {dimension_numbers = #tpu.dot_dimension_numbers<[1], [0], [0], [1], [0, 0, 1, 1], [], []>} : vector<2x128xbf16>, vector<128x32xbf16>, vector<2x32xf32> -> vector<2x32xf32>
    %80 = arith.addf %73, %79 : vector<2x32xf32>
    %81 = vector.extract_strided_slice %9 {offsets = [0, 10, 0], sizes = [2, 1, 128], strides = [1, 1, 1]} : vector<2x16x128xf32> to vector<2x1x128xf32>
    %82 = vector.shape_cast %81 : vector<2x1x128xf32> to vector<2x128xf32>
    %83 = arith.truncf %82 : vector<2x128xf32> to vector<2x128xbf16>
    %c10 = arith.constant 10 : index
    %c0_39 = arith.constant 0 : index
    %c0_40 = arith.constant 0 : index
    %84 = vector.load %arg4[%c10, %c0_39, %c0_40] : memref<16x128x32xbf16, #tpu.memory_space<vmem>>, vector<1x128x32xbf16>
    %85 = vector.shape_cast %84 : vector<1x128x32xbf16> to vector<128x32xbf16>
    %cst_41 = arith.constant dense<0.000000e+00> : vector<2x32xf32>
    %86 = tpu.matmul %83, %85, %cst_41 {dimension_numbers = #tpu.dot_dimension_numbers<[1], [0], [0], [1], [0, 0, 1, 1], [], []>} : vector<2x128xbf16>, vector<128x32xbf16>, vector<2x32xf32> -> vector<2x32xf32>
    %87 = arith.addf %80, %86 : vector<2x32xf32>
    %88 = vector.extract_strided_slice %9 {offsets = [0, 11, 0], sizes = [2, 1, 128], strides = [1, 1, 1]} : vector<2x16x128xf32> to vector<2x1x128xf32>
    %89 = vector.shape_cast %88 : vector<2x1x128xf32> to vector<2x128xf32>
    %90 = arith.truncf %89 : vector<2x128xf32> to vector<2x128xbf16>
    %c11 = arith.constant 11 : index
    %c0_42 = arith.constant 0 : index
    %c0_43 = arith.constant 0 : index
    %91 = vector.load %arg4[%c11, %c0_42, %c0_43] : memref<16x128x32xbf16, #tpu.memory_space<vmem>>, vector<1x128x32xbf16>
    %92 = vector.shape_cast %91 : vector<1x128x32xbf16> to vector<128x32xbf16>
    %cst_44 = arith.constant dense<0.000000e+00> : vector<2x32xf32>
    %93 = tpu.matmul %90, %92, %cst_44 {dimension_numbers = #tpu.dot_dimension_numbers<[1], [0], [0], [1], [0, 0, 1, 1], [], []>} : vector<2x128xbf16>, vector<128x32xbf16>, vector<2x32xf32> -> vector<2x32xf32>
    %94 = arith.addf %87, %93 : vector<2x32xf32>
    %95 = vector.extract_strided_slice %9 {offsets = [0, 12, 0], sizes = [2, 1, 128], strides = [1, 1, 1]} : vector<2x16x128xf32> to vector<2x1x128xf32>
    %96 = vector.shape_cast %95 : vector<2x1x128xf32> to vector<2x128xf32>
    %97 = arith.truncf %96 : vector<2x128xf32> to vector<2x128xbf16>
    %c12 = arith.constant 12 : index
    %c0_45 = arith.constant 0 : index
    %c0_46 = arith.constant 0 : index
    %98 = vector.load %arg4[%c12, %c0_45, %c0_46] : memref<16x128x32xbf16, #tpu.memory_space<vmem>>, vector<1x128x32xbf16>
    %99 = vector.shape_cast %98 : vector<1x128x32xbf16> to vector<128x32xbf16>
    %cst_47 = arith.constant dense<0.000000e+00> : vector<2x32xf32>
    %100 = tpu.matmul %97, %99, %cst_47 {dimension_numbers = #tpu.dot_dimension_numbers<[1], [0], [0], [1], [0, 0, 1, 1], [], []>} : vector<2x128xbf16>, vector<128x32xbf16>, vector<2x32xf32> -> vector<2x32xf32>
    %101 = arith.addf %94, %100 : vector<2x32xf32>
    %102 = vector.extract_strided_slice %9 {offsets = [0, 13, 0], sizes = [2, 1, 128], strides = [1, 1, 1]} : vector<2x16x128xf32> to vector<2x1x128xf32>
    %103 = vector.shape_cast %102 : vector<2x1x128xf32> to vector<2x128xf32>
    %104 = arith.truncf %103 : vector<2x128xf32> to vector<2x128xbf16>
    %c13 = arith.constant 13 : index
    %c0_48 = arith.constant 0 : index
    %c0_49 = arith.constant 0 : index
    %105 = vector.load %arg4[%c13, %c0_48, %c0_49] : memref<16x128x32xbf16, #tpu.memory_space<vmem>>, vector<1x128x32xbf16>
    %106 = vector.shape_cast %105 : vector<1x128x32xbf16> to vector<128x32xbf16>
    %cst_50 = arith.constant dense<0.000000e+00> : vector<2x32xf32>
    %107 = tpu.matmul %104, %106, %cst_50 {dimension_numbers = #tpu.dot_dimension_numbers<[1], [0], [0], [1], [0, 0, 1, 1], [], []>} : vector<2x128xbf16>, vector<128x32xbf16>, vector<2x32xf32> -> vector<2x32xf32>
    %108 = arith.addf %101, %107 : vector<2x32xf32>
    %109 = vector.extract_strided_slice %9 {offsets = [0, 14, 0], sizes = [2, 1, 128], strides = [1, 1, 1]} : vector<2x16x128xf32> to vector<2x1x128xf32>
    %110 = vector.shape_cast %109 : vector<2x1x128xf32> to vector<2x128xf32>
    %111 = arith.truncf %110 : vector<2x128xf32> to vector<2x128xbf16>
    %c14 = arith.constant 14 : index
    %c0_51 = arith.constant 0 : index
    %c0_52 = arith.constant 0 : index
    %112 = vector.load %arg4[%c14, %c0_51, %c0_52] : memref<16x128x32xbf16, #tpu.memory_space<vmem>>, vector<1x128x32xbf16>
    %113 = vector.shape_cast %112 : vector<1x128x32xbf16> to vector<128x32xbf16>
    %cst_53 = arith.constant dense<0.000000e+00> : vector<2x32xf32>
    %114 = tpu.matmul %111, %113, %cst_53 {dimension_numbers = #tpu.dot_dimension_numbers<[1], [0], [0], [1], [0, 0, 1, 1], [], []>} : vector<2x128xbf16>, vector<128x32xbf16>, vector<2x32xf32> -> vector<2x32xf32>
    %115 = arith.addf %108, %114 : vector<2x32xf32>
    %116 = vector.extract_strided_slice %9 {offsets = [0, 15, 0], sizes = [2, 1, 128], strides = [1, 1, 1]} : vector<2x16x128xf32> to vector<2x1x128xf32>
    %117 = vector.shape_cast %116 : vector<2x1x128xf32> to vector<2x128xf32>
    %118 = arith.truncf %117 : vector<2x128xf32> to vector<2x128xbf16>
    %c15 = arith.constant 15 : index
    %c0_54 = arith.constant 0 : index
    %c0_55 = arith.constant 0 : index
    %119 = vector.load %arg4[%c15, %c0_54, %c0_55] : memref<16x128x32xbf16, #tpu.memory_space<vmem>>, vector<1x128x32xbf16>
    %120 = vector.shape_cast %119 : vector<1x128x32xbf16> to vector<128x32xbf16>
    %cst_56 = arith.constant dense<0.000000e+00> : vector<2x32xf32>
    %121 = tpu.matmul %118, %120, %cst_56 {dimension_numbers = #tpu.dot_dimension_numbers<[1], [0], [0], [1], [0, 0, 1, 1], [], []>} : vector<2x128xbf16>, vector<128x32xbf16>, vector<2x32xf32> -> vector<2x32xf32>
    %122 = arith.addf %115, %121 : vector<2x32xf32>
    %c0_57 = arith.constant 0 : index
    %c0_58 = arith.constant 0 : index
    %123 = vector.load %arg5[%c0_57, %c0_58] : memref<1x32xf32, #tpu.memory_space<vmem>>, vector<1x32xf32>
    %124 = vector.broadcast %123 : vector<1x32xf32> to vector<2x32xf32>
    %125 = arith.addf %122, %124 : vector<2x32xf32>
    %cst_59 = arith.constant 0.000000e+00 : f32
    %126 = vector.broadcast %cst_59 : f32 to vector<2x32xf32>
    %127 = arith.maximumf %125, %126 : vector<2x32xf32>
    %c0_60 = arith.constant 0 : index
    %c0_61 = arith.constant 0 : index
    %128 = vector.load %arg8[%c0_60, %c0_61] : memref<2x32xf32, #tpu.memory_space<vmem>>, vector<2x32xf32>
    %c0_62 = arith.constant 0 : index
    %c0_63 = arith.constant 0 : index
    %129 = vector.load %arg9[%c0_62, %c0_63] : memref<2x32xf32, #tpu.memory_space<vmem>>, vector<2x32xf32>
    %130 = tpu.concatenate %127, %128 in 1 : vector<2x32xf32>, vector<2x32xf32> -> vector<2x64xf32>
    %131 = arith.truncf %130 : vector<2x64xf32> to vector<2x64xbf16>
    %c0_64 = arith.constant 0 : index
    %c0_65 = arith.constant 0 : index
    %132 = vector.load %arg6[%c0_64, %c0_65] : memref<64x128xbf16, #tpu.memory_space<vmem>>, vector<64x128xbf16>
    %cst_66 = arith.constant dense<0.000000e+00> : vector<2x128xf32>
    %133 = tpu.matmul %131, %132, %cst_66 {dimension_numbers = #tpu.dot_dimension_numbers<[1], [0], [0], [1], [0, 0, 1, 1], [], []>} : vector<2x64xbf16>, vector<64x128xbf16>, vector<2x128xf32> -> vector<2x128xf32>
    %c0_67 = arith.constant 0 : index
    %c0_68 = arith.constant 0 : index
    %134 = vector.load %arg7[%c0_67, %c0_68] : memref<1x128xf32, #tpu.memory_space<vmem>>, vector<1x128xf32>
    %135 = vector.broadcast %134 : vector<1x128xf32> to vector<2x128xf32>
    %136 = arith.addf %133, %135 : vector<2x128xf32>
    %137 = vector.extract_strided_slice %136 {offsets = [0, 0], sizes = [2, 32], strides = [1, 1]} : vector<2x128xf32> to vector<2x32xf32>
    %cst_69 = arith.constant 0.000000e+00 : f32
    %138 = vector.broadcast %cst_69 : f32 to vector<2x32xf32>
    %139 = arith.subf %138, %137 : vector<2x32xf32>
    %140 = math.exp %139 : vector<2x32xf32>
    %cst_70 = arith.constant 1.000000e+00 : f32
    %141 = vector.broadcast %cst_70 : f32 to vector<2x32xf32>
    %142 = arith.addf %141, %140 : vector<2x32xf32>
    %cst_71 = arith.constant 1.000000e+00 : f32
    %143 = vector.broadcast %cst_71 : f32 to vector<2x32xf32>
    %144 = arith.divf %143, %142 : vector<2x32xf32>
    %145 = vector.extract_strided_slice %136 {offsets = [0, 32], sizes = [2, 32], strides = [1, 1]} : vector<2x128xf32> to vector<2x32xf32>
    %cst_72 = arith.constant 0.000000e+00 : f32
    %146 = vector.broadcast %cst_72 : f32 to vector<2x32xf32>
    %147 = arith.subf %146, %145 : vector<2x32xf32>
    %148 = math.exp %147 : vector<2x32xf32>
    %cst_73 = arith.constant 1.000000e+00 : f32
    %149 = vector.broadcast %cst_73 : f32 to vector<2x32xf32>
    %150 = arith.addf %149, %148 : vector<2x32xf32>
    %cst_74 = arith.constant 1.000000e+00 : f32
    %151 = vector.broadcast %cst_74 : f32 to vector<2x32xf32>
    %152 = arith.divf %151, %150 : vector<2x32xf32>
    %153 = vector.extract_strided_slice %136 {offsets = [0, 64], sizes = [2, 32], strides = [1, 1]} : vector<2x128xf32> to vector<2x32xf32>
    %154 = math.tanh %153 : vector<2x32xf32>
    %155 = vector.extract_strided_slice %136 {offsets = [0, 96], sizes = [2, 32], strides = [1, 1]} : vector<2x128xf32> to vector<2x32xf32>
    %cst_75 = arith.constant 0.000000e+00 : f32
    %156 = vector.broadcast %cst_75 : f32 to vector<2x32xf32>
    %157 = arith.subf %156, %155 : vector<2x32xf32>
    %158 = math.exp %157 : vector<2x32xf32>
    %cst_76 = arith.constant 1.000000e+00 : f32
    %159 = vector.broadcast %cst_76 : f32 to vector<2x32xf32>
    %160 = arith.addf %159, %158 : vector<2x32xf32>
    %cst_77 = arith.constant 1.000000e+00 : f32
    %161 = vector.broadcast %cst_77 : f32 to vector<2x32xf32>
    %162 = arith.divf %161, %160 : vector<2x32xf32>
    %163 = arith.mulf %152, %129 : vector<2x32xf32>
    %164 = arith.mulf %144, %154 : vector<2x32xf32>
    %165 = arith.addf %163, %164 : vector<2x32xf32>
    %166 = math.tanh %165 : vector<2x32xf32>
    %167 = arith.mulf %162, %166 : vector<2x32xf32>
    %cst_78 = arith.constant 0.000000e+00 : f32
    %168 = vector.broadcast %cst_78 : f32 to vector<2x32xf32>
    %169 = arith.maximumf %167, %168 : vector<2x32xf32>
    %cst_79 = arith.constant 0.000000e+00 : f32
    %170 = vector.broadcast %cst_79 : f32 to vector<2x32xf32>
    %171 = tpu.concatenate %169, %167, %165, %170 in 1 : vector<2x32xf32>, vector<2x32xf32>, vector<2x32xf32>, vector<2x32xf32> -> vector<2x128xf32>
    %c0_80 = arith.constant 0 : index
    %c0_81 = arith.constant 0 : index
    %172 = vector.load %arg10[%c0_80, %c0_81] : memref<2x128xf32, #tpu.memory_space<vmem>>, vector<2x128xf32>
    tpu.vector_store %arg10[%c0_80, %c0_81], %171 {strides = array<i32>} : memref<2x128xf32, #tpu.memory_space<vmem>>, vector<2x128xf32>,
    return
  }
  func.func @transform_0(%arg0: i32) -> (i32, i32, i32) {
    %c0_i32 = arith.constant 0 : i32
    %c0_i32_0 = arith.constant 0 : i32
    %c0_i32_1 = arith.constant 0 : i32
    return %arg0, %c0_i32, %c0_i32_0 : i32, i32, i32
  }
  func.func @transform_1(%arg0: i32) -> (i32, i32) {
    %c0_i32 = arith.constant 0 : i32
    %c0_i32_0 = arith.constant 0 : i32
    %c0_i32_1 = arith.constant 0 : i32
    return %c0_i32, %c0_i32_0 : i32, i32
  }
  func.func @transform_2(%arg0: i32) -> (i32, i32) {
    %c0_i32 = arith.constant 0 : i32
    %c0_i32_0 = arith.constant 0 : i32
    %c0_i32_1 = arith.constant 0 : i32
    return %c0_i32, %c0_i32_0 : i32, i32
  }
  func.func @transform_3(%arg0: i32) -> (i32, i32, i32) {
    %c0_i32 = arith.constant 0 : i32
    %c0_i32_0 = arith.constant 0 : i32
    %c0_i32_1 = arith.constant 0 : i32
    %c0_i32_2 = arith.constant 0 : i32
    return %c0_i32, %c0_i32_0, %c0_i32_1 : i32, i32, i32
  }
  func.func @transform_4(%arg0: i32) -> (i32, i32) {
    %c0_i32 = arith.constant 0 : i32
    %c0_i32_0 = arith.constant 0 : i32
    %c0_i32_1 = arith.constant 0 : i32
    return %c0_i32, %c0_i32_0 : i32, i32
  }
  func.func @transform_5(%arg0: i32) -> (i32, i32) {
    %c0_i32 = arith.constant 0 : i32
    %c0_i32_0 = arith.constant 0 : i32
    %c0_i32_1 = arith.constant 0 : i32
    return %c0_i32, %c0_i32_0 : i32, i32
  }
  func.func @transform_6(%arg0: i32) -> (i32, i32) {
    %c0_i32 = arith.constant 0 : i32
    %c0_i32_0 = arith.constant 0 : i32
    %c0_i32_1 = arith.constant 0 : i32
    return %c0_i32, %c0_i32_0 : i32, i32
  }
  func.func @transform_7(%arg0: i32) -> (i32, i32) {
    %c0_i32 = arith.constant 0 : i32
    %c0_i32_0 = arith.constant 0 : i32
    return %arg0, %c0_i32 : i32, i32
  }
  func.func @transform_8(%arg0: i32) -> (i32, i32) {
    %c0_i32 = arith.constant 0 : i32
    %c0_i32_0 = arith.constant 0 : i32
    return %arg0, %c0_i32 : i32, i32
  }
  func.func @transform_9(%arg0: i32) -> (i32, i32) {
    %c0_i32 = arith.constant 0 : i32
    %c0_i32_0 = arith.constant 0 : i32
    return %arg0, %c0_i32 : i32, i32
  }
}

</mosaic_0001>

<llo_original>
// kernel: mul.4
$region0: #{mul.4}
  %s0 = inlined_call_operand.vmem [shape: f32[3,3,4,8], index: 0, kind: input, shape index: {}]
  %s1 = inlined_call_operand.vmem [shape: f32[36,8], index: 1, kind: output, shape index: {}]
  $region1: #{mul.4} parent=0
    #allocation0 [shape = 'u8[36864]{0}', space=vmem, size = 0x9000, scoped, tag = 'scoped mem for input reshape']
    %s3 = sshll.u32 1, 4
    %s4 = ssub.s32 %s3, 1
    %s5 = smul.addr 4, 8
    %s6 = scalar_lea.vmem %s0, %s5
    %v7 = vld [vmem:[%s6] sm:%s4]
    %s8 = scalar_lea.vmem [#allocation0], 64
    %9 = vst [vmem:[%s8] sm:%s4] %v7
    %s10 = smul.addr 4, 7
    %s11 = scalar_lea.vmem %s0, %s10
    %v12 = vld [vmem:[%s11] sm:%s4]
    %s13 = scalar_lea.vmem [#allocation0], 56
    %14 = vst [vmem:[%s13] sm:%s4] %v12
    %s15 = smul.addr 4, 6
    %s16 = scalar_lea.vmem %s0, %s15
    %v17 = vld [vmem:[%s16] sm:%s4]
    %s18 = scalar_lea.vmem [#allocation0], 48
    %19 = vst [vmem:[%s18] sm:%s4] %v17
    %s20 = smul.addr 4, 5
    %s21 = scalar_lea.vmem %s0, %s20
    %v22 = vld [vmem:[%s21] sm:%s4]
    %s23 = scalar_lea.vmem [#allocation0], 40
    %24 = vst [vmem:[%s23] sm:%s4] %v22
    %s25 = smul.addr 4, 4
    %s26 = scalar_lea.vmem %s0, %s25
    %v27 = vld [vmem:[%s26] sm:%s4]
    %s28 = scalar_lea.vmem [#allocation0], 32
    %29 = vst [vmem:[%s28] sm:%s4] %v27
    %s30 = smul.addr 4, 3
    %s31 = scalar_lea.vmem %s0, %s30
    %v32 = vld [vmem:[%s31] sm:%s4]
    %s33 = scalar_lea.vmem [#allocation0], 24
    %34 = vst [vmem:[%s33] sm:%s4] %v32
    %s35 = smul.addr 4, 2
    %s36 = scalar_lea.vmem %s0, %s35
    %v37 = vld [vmem:[%s36] sm:%s4]
    %s38 = scalar_lea.vmem [#allocation0], 16
    %39 = vst [vmem:[%s38] sm:%s4] %v37
    %s40 = scalar_lea.vmem %s0, 4
    %v41 = vld [vmem:[%s40] sm:%s4]
    %s42 = scalar_lea.vmem [#allocation0], 8
    %43 = vst [vmem:[%s42] sm:%s4] %v41
    %v44 = vld [vmem:[%s0] sm:%s4]
    %45 = vst [vmem:[#allocation0] sm:%s4] %v44
    %v46 = vld [vmem:[#allocation0] sm:$0xf]
    %vm47 = vcmask 64512
    %48 = vst.msk [vmem:[%s1] sm:$0xf] %vm47, %v46
    %s49 = scalar_lea.vmem [#allocation0], 8
    %v50 = vld [vmem:[%s49] sm:$0xf]
    %vm51 = vcmask 64512
    %s52 = scalar_lea.vmem %s1, 4
    %53 = vst.msk [vmem:[%s52] sm:$0xf] %vm51, %v50
    %s54 = scalar_lea.vmem [#allocation0], 16
    %v55 = vld [vmem:[%s54] sm:$0xf]
    %vm56 = vcmask 64512
    %s57 = scalar_lea.vmem %s1, 8
    %58 = vst.msk [vmem:[%s57] sm:$0xf] %vm56, %v55
    %s59 = scalar_lea.vmem [#allocation0], 24
    %v60 = vld [vmem:[%s59] sm:$0xf]
    %vm61 = vcmask 64512
    %s62 = scalar_lea.vmem %s1, 12
    %63 = vst.msk [vmem:[%s62] sm:$0xf] %vm61, %v60
    %s64 = scalar_lea.vmem [#allocation0], 32
    %v65 = vld [vmem:[%s64] sm:$0xf]
    %vm66 = vcmask 64512
    %s67 = scalar_lea.vmem %s1, 16
    %68 = vst.msk [vmem:[%s67] sm:$0xf] %vm66, %v65
    %s69 = scalar_lea.vmem [#allocation0], 40
    %v70 = vld [vmem:[%s69] sm:$0xf]
    %vm71 = vcmask 64512
    %s72 = scalar_lea.vmem %s1, 20
    %73 = vst.msk [vmem:[%s72] sm:$0xf] %vm71, %v70
    %s74 = scalar_lea.vmem [#allocation0], 48
    %v75 = vld [vmem:[%s74] sm:$0xf]
    %vm76 = vcmask 64512
    %s77 = scalar_lea.vmem %s1, 24
    %78 = vst.msk [vmem:[%s77] sm:$0xf] %vm76, %v75
    %s79 = scalar_lea.vmem [#allocation0], 56
    %v80 = vld [vmem:[%s79] sm:$0xf]
    %vm81 = vcmask 64512
    %s82 = scalar_lea.vmem %s1, 28
    %83 = vst.msk [vmem:[%s82] sm:$0xf] %vm81, %v80
    %s84 = scalar_lea.vmem [#allocation0], 64
    %v85 = vld [vmem:[%s84] sm:$0xf]
    %vm86 = vcmask 64512
    %s87 = scalar_lea.vmem %s1, 32
    %88 = vst.msk [vmem:[%s87] sm:$0xf] %vm86, %v85

// kernel: tile.8
$region0: #{tile.8}
  #allocation0 [shape = 's32[1]{0}', space=sflag, size = 0x4, scoped, tag = 'scoped memory for tile.8']
  %s0 = inlined_call_operand.vmem [shape: f32[8], index: 0, kind: input, shape index: {}]
  %s1 = inlined_call_operand.vmem [shape: f32[16,8], index: 1, kind: output, shape index: {}]
  // Predicated region
  $region2: #{tile.8} parent=0 // pred_check
    _
  $region3: #{tile.8} parent=0 // pred_check_branch
    %3 = sbr.rel (0) target = $region5
  $region4: #{tile.8} parent=0 // pred_region
    _
  $region5: #{tile.8} parent=0 // pred_fallthru
    _
  %v4 = vld [vmem:[%s0] ss:$0 sm:$0xff]
  %5 = vst [vmem:[%s1] sm:$0xff] %v4
  %s6 = scalar_lea.vmem %s1, 8
  %7 = vst [vmem:[%s6] sm:$0xff] %v4

// kernel: tile.9
$region0: #{tile.9}
  %s0 = inlined_call_operand.vmem [shape: f32[16,8], index: 0, kind: input, shape index: {}]
  %s1 = inlined_call_operand.vmem [shape: f32[1,128], index: 1, kind: output, shape index: {}]
  $region1: #{tile.9} parent=0
    #allocation0 [shape = 'u8[4096]{0}', space=vmem, size = 0x1000, scoped, tag = 'scoped mem for output reshape']
    %v2 = vld [vmem:[%s0] sm:$0x1]
    %vm3 = vcmask 64512
    %4 = vst.msk [vmem:[#allocation0] sm:$0x1] %vm3, %v2
    %s5 = scalar_lea.vmem %s0, 15
    %v6 = vld [vmem:[%s5] sm:$0x1]
    %7 = vrot.lane.b32.xlu0 %v6, 120
    %v8 = vpop.permute.xlu0 %7
    %vm9 = vcmask 1048512
    %10 = vst.msk [vmem:[#allocation0] sm:$0x1] %vm9, %v8
    %s11 = scalar_lea.vmem %s0, 14
    %v12 = vld [vmem:[%s11] sm:$0x1]
    %13 = vrot.lane.b32.xlu0 %v12, 112
    %v14 = vpop.permute.xlu0 %13
    %vm15 = vcmask 982912
    %16 = vst.msk [vmem:[#allocation0] sm:$0x1] %vm15, %v14
    %s17 = scalar_lea.vmem %s0, 13
    %v18 = vld [vmem:[%s17] sm:$0x1]
    %19 = vrot.lane.b32.xlu0 %v18, 104
    %v20 = vpop.permute.xlu0 %19
    %vm21 = vcmask 917312
    %22 = vst.msk [vmem:[#allocation0] sm:$0x1] %vm21, %v20
    %s23 = scalar_lea.vmem %s0, 12
    %v24 = vld [vmem:[%s23] sm:$0x1]
    %25 = vrot.lane.b32.xlu0 %v24, 96
    %v26 = vpop.permute.xlu0 %25
    %vm27 = vcmask 851712
    %28 = vst.msk [vmem:[#allocation0] sm:$0x1] %vm27, %v26
    %s29 = scalar_lea.vmem %s0, 11
    %v30 = vld [vmem:[%s29] sm:$0x1]
    %31 = vrot.lane.b32.xlu0 %v30, 88
    %v32 = vpop.permute.xlu0 %31
    %vm33 = vcmask 786112
    %34 = vst.msk [vmem:[#allocation0] sm:$0x1] %vm33, %v32
    %s35 = scalar_lea.vmem %s0, 10
    %v36 = vld [vmem:[%s35] sm:$0x1]
    %37 = vrot.lane.b32.xlu0 %v36, 80
    %v38 = vpop.permute.xlu0 %37
    %vm39 = vcmask 720512
    %40 = vst.msk [vmem:[#allocation0] sm:$0x1] %vm39, %v38
    %s41 = scalar_lea.vmem %s0, 9
    %v42 = vld [vmem:[%s41] sm:$0x1]
    %43 = vrot.lane.b32.xlu0 %v42, 72
    %v44 = vpop.permute.xlu0 %43
    %vm45 = vcmask 654912
    %46 = vst.msk [vmem:[#allocation0] sm:$0x1] %vm45, %v44
    %s47 = scalar_lea.vmem %s0, 8
    %v48 = vld [vmem:[%s47] sm:$0x1]
    %49 = vrot.lane.b32.xlu0 %v48, 64
    %v50 = vpop.permute.xlu0 %49
    %vm51 = vcmask 589312
    %52 = vst.msk [vmem:[#allocation0] sm:$0x1] %vm51, %v50
    %s53 = scalar_lea.vmem %s0, 7
    %v54 = vld [vmem:[%s53] sm:$0x1]
    %55 = vrot.lane.b32.xlu0 %v54, 56
    %v56 = vpop.permute.xlu0 %55
    %vm57 = vcmask 523712
    %58 = vst.msk [vmem:[#allocation0] sm:$0x1] %vm57, %v56
    %s59 = scalar_lea.vmem %s0, 6
    %v60 = vld [vmem:[%s59] sm:$0x1]
    %61 = vrot.lane.b32.xlu0 %v60, 48
    %v62 = vpop.permute.xlu0 %61
    %vm63 = vcmask 458112
    %64 = vst.msk [vmem:[#allocation0] sm:$0x1] %vm63, %v62
    %s65 = scalar_lea.vmem %s0, 5
    %v66 = vld [vmem:[%s65] sm:$0x1]
    %67 = vrot.lane.b32.xlu0 %v66, 40
    %v68 = vpop.permute.xlu0 %67
    %vm69 = vcmask 392512
    %70 = vst.msk [vmem:[#allocation0] sm:$0x1] %vm69, %v68
    %s71 = scalar_lea.vmem %s0, 4
    %v72 = vld [vmem:[%s71] sm:$0x1]
    %73 = vrot.lane.b32.xlu0 %v72, 32
    %v74 = vpop.permute.xlu0 %73
    %vm75 = vcmask 326912
    %76 = vst.msk [vmem:[#allocation0] sm:$0x1] %vm75, %v74
    %s77 = scalar_lea.vmem %s0, 3
    %v78 = vld [vmem:[%s77] sm:$0x1]
    %79 = vrot.lane.b32.xlu0 %v78, 24
    %v80 = vpop.permute.xlu0 %79
    %vm81 = vcmask 261312
    %82 = vst.msk [vmem:[#allocation0] sm:$0x1] %vm81, %v80
    %s83 = scalar_lea.vmem %s0, 2
    %v84 = vld [vmem:[%s83] sm:$0x1]
    %85 = vrot.lane.b32.xlu0 %v84, 16
    %v86 = vpop.permute.xlu0 %85
    %vm87 = vcmask 195712
    %88 = vst.msk [vmem:[#allocation0] sm:$0x1] %vm87, %v86
    %s89 = scalar_lea.vmem %s0, 1
    %v90 = vld [vmem:[%s89] sm:$0x1]
    %91 = vrot.lane.b32.xlu0 %v90, 8
    %v92 = vpop.permute.xlu0 %91
    %vm93 = vcmask 130112
    %94 = vst.msk [vmem:[#allocation0] sm:$0x1] %vm93, %v92
    %s96 = sshll.u32 1, 1
    %s97 = ssub.s32 %s96, 1
    %v99 = vld [vmem:[#allocation0] sm:%s97]
    %s100 = sshll.u32 1, 1
    %s101 = ssub.s32 %s100, 1
    %102 = vst [vmem:[%s1] sm:%s101] %v99

// kernel: conv_lstm_forward.1
$region0: #{conv_lstm_forward.1}
  #allocation0 [shape = 'u32[]', space=smem, size = 0x4, offset = 0x4, fixed_abs, tag = 'smem constant byte address 0x4 - core index']
  #allocation1 [shape = 'u32[144,128]{1,0:T(1,128)}', space=vmem, size = 0x12000, scoped, tag = 'internal scratch']
  %s0 = inlined_call_operand.vmem [shape: bf16[2,16,576], index: 0, kind: input, shape index: {}]
  %s1 = inlined_call_operand.vmem [shape: bf16[576,128], index: 1, kind: input, shape index: {}]
  %s2 = inlined_call_operand.vmem [shape: f32[1,128], index: 2, kind: input, shape index: {}]
  %s3 = inlined_call_operand.vmem [shape: bf16[16,128,32], index: 3, kind: input, shape index: {}]
  %s4 = inlined_call_operand.vmem [shape: f32[1,32], index: 4, kind: input, shape index: {}]
  %s5 = inlined_call_operand.vmem [shape: bf16[64,128], index: 5, kind: input, shape index: {}]
  %s6 = inlined_call_operand.vmem [shape: f32[1,128], index: 6, kind: input, shape index: {}]
  %s7 = inlined_call_operand.vmem [shape: f32[2,32], index: 7, kind: input, shape index: {}]
  %s8 = inlined_call_operand.vmem [shape: f32[2,32], index: 8, kind: input, shape index: {}]
  %s9 = inlined_call_operand.vmem [shape: f32[2,128], index: 9, kind: output, shape index: {}]
  %s10 = sld [smem:[#allocation0]]
  $region46: #{conv_lstm_forward.1} parent=0
    _
  %s12 = ssub.s32 1, %s10
  %s13 = scalar_select 0, %s12, %s10
  // Predicated region
  $region2: #{conv_lstm_forward.1} parent=0 // pred_check
    _
  $region3: #{conv_lstm_forward.1} parent=0 // pred_check_branch
    %15 = sbr.rel (0) target = $region5
  $region4: #{conv_lstm_forward.1} parent=0 // pred_region
    _
  $region5: #{conv_lstm_forward.1} parent=0 // pred_fallthru
    _
  // Predicated region
  $region6: #{conv_lstm_forward.1} parent=0 // pred_check
    _
  $region7: #{conv_lstm_forward.1} parent=0 // pred_check_branch
    %17 = sbr.rel (0) target = $region9
  $region8: #{conv_lstm_forward.1} parent=0 // pred_region
    _
  $region9: #{conv_lstm_forward.1} parent=0 // pred_fallthru
    _
  // Predicated region
  $region10: #{conv_lstm_forward.1} parent=0 // pred_check
    _
  $region11: #{conv_lstm_forward.1} parent=0 // pred_check_branch
    %19 = sbr.rel (0) target = $region13
  $region12: #{conv_lstm_forward.1} parent=0 // pred_region
    _
  $region13: #{conv_lstm_forward.1} parent=0 // pred_fallthru
    _
  // Predicated region
  $region14: #{conv_lstm_forward.1} parent=0 // pred_check
    _
  $region15: #{conv_lstm_forward.1} parent=0 // pred_check_branch
    %21 = sbr.rel (0) target = $region17
  $region16: #{conv_lstm_forward.1} parent=0 // pred_region
    _
  $region17: #{conv_lstm_forward.1} parent=0 // pred_fallthru
    _
  // Predicated region
  $region18: #{conv_lstm_forward.1} parent=0 // pred_check
    _
  $region19: #{conv_lstm_forward.1} parent=0 // pred_check_branch
    %23 = sbr.rel (0) target = $region21
  $region20: #{conv_lstm_forward.1} parent=0 // pred_region
    _
  $region21: #{conv_lstm_forward.1} parent=0 // pred_fallthru
    _
  // Predicated region
  $region22: #{conv_lstm_forward.1} parent=0 // pred_check
    _
  $region23: #{conv_lstm_forward.1} parent=0 // pred_check_branch
    %25 = sbr.rel (0) target = $region25
  $region24: #{conv_lstm_forward.1} parent=0 // pred_region
    _
  $region25: #{conv_lstm_forward.1} parent=0 // pred_fallthru
    _
  // Predicated region
  $region26: #{conv_lstm_forward.1} parent=0 // pred_check
    _
  $region27: #{conv_lstm_forward.1} parent=0 // pred_check_branch
    %27 = sbr.rel (0) target = $region29
  $region28: #{conv_lstm_forward.1} parent=0 // pred_region
    _
  $region29: #{conv_lstm_forward.1} parent=0 // pred_fallthru
    _
  // Predicated region
  $region30: #{conv_lstm_forward.1} parent=0 // pred_check
    _
  $region31: #{conv_lstm_forward.1} parent=0 // pred_check_branch
    %29 = sbr.rel (0) target = $region33
  $region32: #{conv_lstm_forward.1} parent=0 // pred_region
    _
  $region33: #{conv_lstm_forward.1} parent=0 // pred_fallthru
    _
  // Predicated region
  $region34: #{conv_lstm_forward.1} parent=0 // pred_check
    _
  $region35: #{conv_lstm_forward.1} parent=0 // pred_check_branch
    %31 = sbr.rel (0) target = $region37
  $region36: #{conv_lstm_forward.1} parent=0 // pred_region
    _
  $region37: #{conv_lstm_forward.1} parent=0 // pred_fallthru
    _
  %v33 = vld [vmem:[%s0] sm:$0xff]
  %v34 = vld [vmem:[%s0 + $0x8] sm:$0xff]
  %v35 = vld [vmem:[%s0 + $0x10] sm:$0xf]
  %v36 = vld [vmem:[%s0 + $0x14] sm:$0xff]
  %v37 = vld [vmem:[%s0 + $0x1c] sm:$0xff]
  %v38 = vld [vmem:[%s0 + $0x24] sm:$0xf]
  %v39 = vld [vmem:[%s0 + $0x28] sm:$0xff]
  %v40 = vld [vmem:[%s0 + $0x30] sm:$0xff]
  %v41 = vld [vmem:[%s0 + $0x38] sm:$0xf]
  %v42 = vld [vmem:[%s0 + $0x3c] sm:$0xff]
  %v43 = vld [vmem:[%s0 + $0x44] sm:$0xff]
  %v44 = vld [vmem:[%s0 + $0x4c] sm:$0xf]
  %v45 = vld [vmem:[%s1] sm:$0xf]
  %v46 = vld [vmem:[%s1 + $0x4] sm:$0xf]
  %v47 = vld [vmem:[%s1 + $0x8] sm:$0xf]
  %v48 = vld [vmem:[%s1 + $0xc] sm:$0xf]
  %v49 = vld [vmem:[%s1 + $0x10] sm:$0xf]
  %v50 = vld [vmem:[%s1 + $0x14] sm:$0xf]
  %v51 = vld [vmem:[%s1 + $0x18] sm:$0xf]
  %v52 = vld [vmem:[%s1 + $0x1c] sm:$0xf]
  %v53 = vld [vmem:[%s1 + $0x20] sm:$0xf]
  %v54 = vld [vmem:[%s1 + $0x24] sm:$0xf]
  %v55 = vld [vmem:[%s1 + $0x28] sm:$0xf]
  %v56 = vld [vmem:[%s1 + $0x2c] sm:$0xf]
  %v57 = vld [vmem:[%s1 + $0x30] sm:$0xf]
  %v58 = vld [vmem:[%s1 + $0x34] sm:$0xf]
  %v59 = vld [vmem:[%s1 + $0x38] sm:$0xf]
  %v60 = vld [vmem:[%s1 + $0x3c] sm:$0xf]
  %v61 = vld [vmem:[%s1 + $0x40] sm:$0xf]
  %v62 = vld [vmem:[%s1 + $0x44] sm:$0xf]
  %v63 = vld [vmem:[%s1 + $0x48] sm:$0xf]
  %v64 = vld [vmem:[%s1 + $0x4c] sm:$0xf]
  %v65 = vld [vmem:[%s1 + $0x50] sm:$0xf]
  %v66 = vld [vmem:[%s1 + $0x54] sm:$0xf]
  %v67 = vld [vmem:[%s1 + $0x58] sm:$0xf]
  %v68 = vld [vmem:[%s1 + $0x5c] sm:$0xf]
  %v69 = vld [vmem:[%s1 + $0x60] sm:$0xf]
  %v70 = vld [vmem:[%s1 + $0x64] sm:$0xf]
  %v71 = vld [vmem:[%s1 + $0x68] sm:$0xf]
  %v72 = vld [vmem:[%s1 + $0x6c] sm:$0xf]
  %v73 = vld [vmem:[%s1 + $0x70] sm:$0xf]
  %v74 = vld [vmem:[%s1 + $0x74] sm:$0xf]
  %v75 = vld [vmem:[%s1 + $0x78] sm:$0xf]
  %v76 = vld [vmem:[%s1 + $0x7c] sm:$0xf]
  %v77 = vld [vmem:[%s1 + $0x80] sm:$0xf]
  %v78 = vld [vmem:[%s1 + $0x84] sm:$0xf]
  %v79 = vld [vmem:[%s1 + $0x88] sm:$0xf]
  %v80 = vld [vmem:[%s1 + $0x8c] sm:$0xf]
  %v81 = vld [vmem:[%s1 + $0x90] sm:$0xf]
  %v82 = vld [vmem:[%s1 + $0x94] sm:$0xf]
  %v83 = vld [vmem:[%s1 + $0x98] sm:$0xf]
  %v84 = vld [vmem:[%s1 + $0x9c] sm:$0xf]
  %v85 = vld [vmem:[%s1 + $0xa0] sm:$0xf]
  %v86 = vld [vmem:[%s1 + $0xa4] sm:$0xf]
  %v87 = vld [vmem:[%s1 + $0xa8] sm:$0xf]
  %v88 = vld [vmem:[%s1 + $0xac] sm:$0xf]
  %v89 = vld [vmem:[%s1 + $0xb0] sm:$0xf]
  %v90 = vld [vmem:[%s1 + $0xb4] sm:$0xf]
  %v91 = vld [vmem:[%s1 + $0xb8] sm:$0xf]
  %v92 = vld [vmem:[%s1 + $0xbc] sm:$0xf]
  %v93 = vld [vmem:[%s1 + $0xc0] sm:$0xf]
  %v94 = vld [vmem:[%s1 + $0xc4] sm:$0xf]
  %v95 = vld [vmem:[%s1 + $0xc8] sm:$0xf]
  %v96 = vld [vmem:[%s1 + $0xcc] sm:$0xf]
  %v97 = vld [vmem:[%s1 + $0xd0] sm:$0xf]
  %v98 = vld [vmem:[%s1 + $0xd4] sm:$0xf]
  %v99 = vld [vmem:[%s1 + $0xd8] sm:$0xf]
  %v100 = vld [vmem:[%s1 + $0xdc] sm:$0xf]
  %v101 = vld [vmem:[%s1 + $0xe0] sm:$0xf]
  %v102 = vld [vmem:[%s1 + $0xe4] sm:$0xf]
  %v103 = vld [vmem:[%s1 + $0xe8] sm:$0xf]
  %v104 = vld [vmem:[%s1 + $0xec] sm:$0xf]
  %v105 = vld [vmem:[%s1 + $0xf0] sm:$0xf]
  %v106 = vld [vmem:[%s1 + $0xf4] sm:$0xf]
  %v107 = vld [vmem:[%s1 + $0xf8] sm:$0xf]
  %v108 = vld [vmem:[%s1 + $0xfc] sm:$0xf]
  %v109 = vld [vmem:[%s1 + $0x100] sm:$0xf]
  %v110 = vld [vmem:[%s1 + $0x104] sm:$0xf]
  %v111 = vld [vmem:[%s1 + $0x108] sm:$0xf]
  %v112 = vld [vmem:[%s1 + $0x10c] sm:$0xf]
  %v113 = vld [vmem:[%s1 + $0x110] sm:$0xf]
  %v114 = vld [vmem:[%s1 + $0x114] sm:$0xf]
  %v115 = vld [vmem:[%s1 + $0x118] sm:$0xf]
  %v116 = vld [vmem:[%s1 + $0x11c] sm:$0xf]
  %v117 = vld [vmem:[%s2] sm:$0x1]
  %v119 = vlaneseq
  %v120 = vshrl.u32 %v119, 7
  %v121 = vsub.s32 0, %v120
  %v122 = vrot.slane %v117, %v121
  %v136 = vunpack.c.l.b16 %v33
  %v137 = vunpack.c.h.b16 %v33
  %v138 = vunpack.c.l.b16 %v34
  %v139 = vunpack.c.h.b16 %v34
  %v140 = vunpack.c.l.b16 %v35
  %v141 = vunpack.c.l.b16 %v36
  %v142 = vunpack.c.h.b16 %v36
  %v143 = vunpack.c.l.b16 %v37
  %v144 = vunpack.c.h.b16 %v37
  %v145 = vunpack.c.l.b16 %v38
  %v146 = vunpack.c.l.b16 %v39
  %v147 = vunpack.c.h.b16 %v39
  %v148 = vunpack.c.l.b16 %v40
  %v149 = vunpack.c.h.b16 %v40
  %v150 = vunpack.c.l.b16 %v41
  %v151 = vunpack.c.l.b16 %v42
  %v152 = vunpack.c.h.b16 %v42
  %v153 = vunpack.c.l.b16 %v43
  %v154 = vunpack.c.h.b16 %v43
  %v155 = vunpack.c.l.b16 %v44
  %v156 = vpack.c.b16 %v141, %v136
  %v157 = vpack.c.b16 %v142, %v137
  %v158 = vpack.c.b16 %v143, %v138
  %v159 = vpack.c.b16 %v144, %v139
  %v160 = vpack.c.b16 %v145, %v140
  %v161 = vpack.c.b16 %v151, %v146
  %v162 = vpack.c.b16 %v152, %v147
  %v163 = vpack.c.b16 %v153, %v148
  %v164 = vpack.c.b16 %v154, %v149
  %v165 = vpack.c.b16 %v155, %v150
  %v246 = vunpack.c.l.b16 %v45
  %v247 = vunpack.c.l.b16 %v46
  %v248 = vunpack.c.l.b16 %v47
  %v249 = vunpack.c.l.b16 %v48
  %v250 = vunpack.c.l.b16 %v49
  %v251 = vunpack.c.l.b16 %v50
  %v252 = vunpack.c.l.b16 %v51
  %v253 = vunpack.c.l.b16 %v52
  %v254 = vunpack.c.l.b16 %v53
  %v255 = vunpack.c.l.b16 %v54
  %v256 = vunpack.c.l.b16 %v55
  %v257 = vunpack.c.l.b16 %v56
  %v258 = vunpack.c.l.b16 %v57
  %v259 = vunpack.c.l.b16 %v58
  %v260 = vunpack.c.l.b16 %v59
  %v261 = vunpack.c.l.b16 %v60
  %v262 = vunpack.c.l.b16 %v61
  %v263 = vunpack.c.l.b16 %v62
  %v264 = vunpack.c.l.b16 %v63
  %v265 = vunpack.c.l.b16 %v64
  %v266 = vunpack.c.l.b16 %v65
  %v267 = vunpack.c.l.b16 %v66
  %v268 = vunpack.c.l.b16 %v67
  %v269 = vunpack.c.l.b16 %v68
  %v270 = vunpack.c.l.b16 %v69
  %v271 = vunpack.c.l.b16 %v70
  %v272 = vunpack.c.l.b16 %v71
  %v273 = vunpack.c.l.b16 %v72
  %v274 = vunpack.c.l.b16 %v73
  %v275 = vunpack.c.l.b16 %v74
  %v276 = vunpack.c.l.b16 %v75
  %v277 = vunpack.c.l.b16 %v76
  %v278 = vunpack.c.l.b16 %v77
  %v279 = vunpack.c.l.b16 %v78
  %v280 = vunpack.c.l.b16 %v79
  %v281 = vunpack.c.l.b16 %v80
  %v282 = vunpack.c.l.b16 %v81
  %v283 = vunpack.c.l.b16 %v82
  %v284 = vunpack.c.l.b16 %v83
  %v285 = vunpack.c.l.b16 %v84
  %v286 = vunpack.c.l.b16 %v85
  %v287 = vunpack.c.l.b16 %v86
  %v288 = vunpack.c.l.b16 %v87
  %v289 = vunpack.c.l.b16 %v88
  %v290 = vunpack.c.l.b16 %v89
  %v291 = vunpack.c.l.b16 %v90
  %v292 = vunpack.c.l.b16 %v91
  %v293 = vunpack.c.l.b16 %v92
  %v294 = vunpack.c.l.b16 %v93
  %v295 = vunpack.c.l.b16 %v94
  %v296 = vunpack.c.l.b16 %v95
  %v297 = vunpack.c.l.b16 %v96
  %v298 = vunpack.c.l.b16 %v97
  %v299 = vunpack.c.l.b16 %v98
  %v300 = vunpack.c.l.b16 %v99
  %v301 = vunpack.c.l.b16 %v100
  %v302 = vunpack.c.l.b16 %v101
  %v303 = vunpack.c.l.b16 %v102
  %v304 = vunpack.c.l.b16 %v103
  %v305 = vunpack.c.l.b16 %v104
  %v306 = vunpack.c.l.b16 %v105
  %v307 = vunpack.c.l.b16 %v106
  %v308 = vunpack.c.l.b16 %v107
  %v309 = vunpack.c.l.b16 %v108
  %v310 = vunpack.c.l.b16 %v109
  %v311 = vunpack.c.l.b16 %v110
  %v312 = vunpack.c.l.b16 %v111
  %v313 = vunpack.c.l.b16 %v112
  %v314 = vunpack.c.l.b16 %v113
  %v315 = vunpack.c.l.b16 %v114
  %v316 = vunpack.c.l.b16 %v115
  %v317 = vunpack.c.l.b16 %v116
  %v318 = vpack.c.b16 %v247, %v246
  %v319 = vpack.c.b16 %v249, %v248
  %v320 = vpack.c.b16 %v251, %v250
  %v321 = vpack.c.b16 %v253, %v252
  %v322 = vpack.c.b16 %v255, %v254
  %v323 = vpack.c.b16 %v257, %v256
  %v324 = vpack.c.b16 %v259, %v258
  %v325 = vpack.c.b16 %v261, %v260
  %v326 = vpack.c.b16 %v263, %v262
  %v327 = vpack.c.b16 %v265, %v264
  %v328 = vpack.c.b16 %v267, %v266
  %v329 = vpack.c.b16 %v269, %v268
  %v330 = vpack.c.b16 %v271, %v270
  %v331 = vpack.c.b16 %v273, %v272
  %v332 = vpack.c.b16 %v275, %v274
  %v333 = vpack.c.b16 %v277, %v276
  %v334 = vpack.c.b16 %v279, %v278
  %v335 = vpack.c.b16 %v281, %v280
  %v336 = vpack.c.b16 %v283, %v282
  %v337 = vpack.c.b16 %v285, %v284
  %v338 = vpack.c.b16 %v287, %v286
  %v339 = vpack.c.b16 %v289, %v288
  %v340 = vpack.c.b16 %v291, %v290
  %v341 = vpack.c.b16 %v293, %v292
  %v342 = vpack.c.b16 %v295, %v294
  %v343 = vpack.c.b16 %v297, %v296
  %v344 = vpack.c.b16 %v299, %v298
  %v345 = vpack.c.b16 %v301, %v300
  %v346 = vpack.c.b16 %v303, %v302
  %v347 = vpack.c.b16 %v305, %v304
  %v348 = vpack.c.b16 %v307, %v306
  %v349 = vpack.c.b16 %v309, %v308
  %v350 = vpack.c.b16 %v311, %v310
  %v351 = vpack.c.b16 %v313, %v312
  %v352 = vpack.c.b16 %v315, %v314
  %v353 = vpack.c.b16 %v317, %v316
  %vm390 = vcmask 523264
  %v392 = vsel %vm390, %v160, 0
  %v395 = vsel %vm390, %v165, 0
  %397 = vmatprep.subr.bf16.mxu0 0
  %398 = vmatpush1.bf16.msra.mxu0 %v325
  %399 = vmatprep.subr.bf16.mxu0 0
  %400 = vmatpush1.bf16.msra.mxu0 %v324
  %401 = vmatprep.subr.bf16.mxu0 0
  %402 = vmatpush1.bf16.msra.mxu0 %v323
  %403 = vmatprep.subr.bf16.mxu0 0
  %404 = vmatpush1.bf16.msra.mxu0 %v322
  %405 = vmatprep.subr.bf16.mxu0 0
  %406 = vmatpush1.bf16.msra.mxu0 %v321
  %407 = vmatprep.subr.bf16.mxu0 0
  %408 = vmatpush1.bf16.msra.mxu0 %v320
  %409 = vmatprep.subr.bf16.mxu0 0
  %410 = vmatpush1.bf16.msra.mxu0 %v319
  %411 = vmatprep.subr.bf16.mxu0 0
  %412 = vmatpush1.bf16.msra.mxu0 %v318
  %413 = vmatprep.subr.bf16.mxu0 0
  %414 = vmatpush2.bf16.msra.mxu0 %v333
  %415 = vmatprep.subr.bf16.mxu0 0
  %416 = vmatpush2.bf16.msra.mxu0 %v332
  %417 = vmatprep.subr.bf16.mxu0 0
  %418 = vmatpush2.bf16.msra.mxu0 %v331
  %419 = vmatprep.subr.bf16.mxu0 0
  %420 = vmatpush2.bf16.msra.mxu0 %v330
  %421 = vmatprep.subr.bf16.mxu0 0
  %422 = vmatpush2.bf16.msra.mxu0 %v329
  %423 = vmatprep.subr.bf16.mxu0 0
  %424 = vmatpush2.bf16.msra.mxu0 %v328
  %425 = vmatprep.subr.bf16.mxu0 0
  %426 = vmatpush2.bf16.msra.mxu0 %v327
  %427 = vmatprep.subr.bf16.mxu0 0
  %428 = vmatpush2.bf16.msra.mxu0 %v326
  %429 = vmatprep.mubr.bf16.mxu0 %v157
  %430 = vmatmul.mubr.bf16.gmra.mxu0 %v156
  %v431 = vpop.f32.mrf.mxu0
  %v432 = vadd.f32 %v122, %v431
  %v433 = vpop.f32.mrf.mxu0
  %v434 = vpop.f32.mrf.mxu0
  %v435 = vadd.f32 %v122, %v434
  %v436 = vpop.f32.mrf.mxu0
  %437 = vmatprep.mubr.bf16.mxu0 %v162
  %438 = vmatmul.mubr.bf16.gmra.mxu0 %v161
  %v439 = vpop.f32.mrf.mxu0
  %v440 = vadd.f32 %v122, %v439
  %v441 = vpop.f32.mrf.mxu0
  %v442 = vpop.f32.mrf.mxu0
  %v443 = vadd.f32 %v122, %v442
  %v444 = vpop.f32.mrf.mxu0
  %445 = vdwg.mxu0
  %446 = vmatprep.subr.bf16.mxu0 0
  %447 = vmatpush1.bf16.msra.mxu0 %v341
  %448 = vmatprep.subr.bf16.mxu0 0
  %449 = vmatpush1.bf16.msra.mxu0 %v340
  %450 = vmatprep.subr.bf16.mxu0 0
  %451 = vmatpush1.bf16.msra.mxu0 %v339
  %452 = vmatprep.subr.bf16.mxu0 0
  %453 = vmatpush1.bf16.msra.mxu0 %v338
  %454 = vmatprep.subr.bf16.mxu0 0
  %455 = vmatpush1.bf16.msra.mxu0 %v337
  %456 = vmatprep.subr.bf16.mxu0 0
  %457 = vmatpush1.bf16.msra.mxu0 %v336
  %458 = vmatprep.subr.bf16.mxu0 0
  %459 = vmatpush1.bf16.msra.mxu0 %v335
  %460 = vmatprep.subr.bf16.mxu0 0
  %461 = vmatpush1.bf16.msra.mxu0 %v334
  %462 = vmatprep.subr.bf16.mxu0 0
  %463 = vmatpush2.bf16.msra.mxu0 %v349
  %464 = vmatprep.subr.bf16.mxu0 0
  %465 = vmatpush2.bf16.msra.mxu0 %v348
  %466 = vmatprep.subr.bf16.mxu0 0
  %467 = vmatpush2.bf16.msra.mxu0 %v347
  %468 = vmatprep.subr.bf16.mxu0 0
  %469 = vmatpush2.bf16.msra.mxu0 %v346
  %470 = vmatprep.subr.bf16.mxu0 0
  %471 = vmatpush2.bf16.msra.mxu0 %v345
  %472 = vmatprep.subr.bf16.mxu0 0
  %473 = vmatpush2.bf16.msra.mxu0 %v344
  %474 = vmatprep.subr.bf16.mxu0 0
  %475 = vmatpush2.bf16.msra.mxu0 %v343
  %476 = vmatprep.subr.bf16.mxu0 0
  %477 = vmatpush2.bf16.msra.mxu0 %v342
  %478 = vmatprep.mubr.bf16.mxu0 %v159
  %479 = vmatmul.mubr.bf16.gmra.mxu0 %v158
  %v480 = vpop.f32.mrf.mxu0
  %v481 = vadd.f32 %v432, %v480
  %v482 = vpop.f32.mrf.mxu0
  %v483 = vpop.f32.mrf.mxu0
  %v484 = vadd.f32 %v435, %v483
  %v485 = vpop.f32.mrf.mxu0
  %486 = vmatprep.mubr.bf16.mxu0 %v164
  %487 = vmatmul.mubr.bf16.gmra.mxu0 %v163
  %v488 = vpop.f32.mrf.mxu0
  %v489 = vadd.f32 %v440, %v488
  %v490 = vpop.f32.mrf.mxu0
  %v491 = vpop.f32.mrf.mxu0
  %v492 = vadd.f32 %v443, %v491
  %v493 = vpop.f32.mrf.mxu0
  %494 = vdwg.mxu0
  %495 = vmatprep.subr.bf16.mxu0 0
  %496 = vmatpush1.bf16.msra.mxu0 0
  %497 = vmatprep.subr.bf16.mxu0 0
  %498 = vmatpush1.bf16.msra.mxu0 0
  %499 = vmatprep.subr.bf16.mxu0 0
  %500 = vmatpush1.bf16.msra.mxu0 0
  %501 = vmatprep.subr.bf16.mxu0 0
  %502 = vmatpush1.bf16.msra.mxu0 0
  %503 = vmatprep.subr.bf16.mxu0 0
  %504 = vmatpush1.bf16.msra.mxu0 %v353
  %505 = vmatprep.subr.bf16.mxu0 0
  %506 = vmatpush1.bf16.msra.mxu0 %v352
  %507 = vmatprep.subr.bf16.mxu0 0
  %508 = vmatpush1.bf16.msra.mxu0 %v351
  %509 = vmatprep.subr.bf16.mxu0 0
  %510 = vmatpush1.bf16.msra.mxu0 %v350
  %511 = vmatprep.subr.bf16.mxu0 0
  %512 = vmatpush2.bf16.msra.mxu0 0
  %513 = vmatprep.subr.bf16.mxu0 0
  %514 = vmatpush2.bf16.msra.mxu0 0
  %515 = vmatprep.subr.bf16.mxu0 0
  %516 = vmatpush2.bf16.msra.mxu0 0
  %517 = vmatprep.subr.bf16.mxu0 0
  %518 = vmatpush2.bf16.msra.mxu0 0
  %519 = vmatprep.subr.bf16.mxu0 0
  %520 = vmatpush2.bf16.msra.mxu0 0
  %521 = vmatprep.subr.bf16.mxu0 0
  %522 = vmatpush2.bf16.msra.mxu0 0
  %523 = vmatprep.subr.bf16.mxu0 0
  %524 = vmatpush2.bf16.msra.mxu0 0
  %525 = vmatprep.subr.bf16.mxu0 0
  %526 = vmatpush2.bf16.msra.mxu0 0
  %527 = vmatprep.mubr.bf16.mxu0 0
  %528 = vmatmul.mubr.bf16.gmra.mxu0 %v392
  %v529 = vpop.f32.mrf.mxu0
  %v530 = vadd.f32 %v481, %v529
  %v531 = vpop.f32.mrf.mxu0
  %v532 = vpop.f32.mrf.mxu0
  %v533 = vadd.f32 %v484, %v532
  %v534 = vpop.f32.mrf.mxu0
  %535 = vmatprep.mubr.bf16.mxu0 0
  %536 = vmatmul.mubr.bf16.gmra.mxu0 %v395
  %v537 = vpop.f32.mrf.mxu0
  %v538 = vadd.f32 %v489, %v537
  %v539 = vpop.f32.mrf.mxu0
  %v540 = vpop.f32.mrf.mxu0
  %v541 = vadd.f32 %v492, %v540
  %v542 = vpop.f32.mrf.mxu0
  %543 = vdwg.mxu0
  %v544 = vmax.f32 %v530, 0.0
  %v545 = vmax.f32 %v533, 0.0
  %v546 = vmax.f32 %v538, 0.0
  %v547 = vmax.f32 %v541, 0.0
  %v548 = vpack.c.bf16 %v544, %v544
  %v549 = vpack.c.bf16 %v546, %v546
  %v550 = vld [vmem:[%s3] sm:$0xf]
  %v551 = vld [vmem:[%s3 + $0x4] sm:$0xf]
  %v552 = vld [vmem:[%s3 + $0x8] sm:$0xf]
  %v553 = vld [vmem:[%s3 + $0xc] sm:$0xf]
  %v554 = vld [vmem:[%s3 + $0x10] sm:$0xf]
  %v555 = vld [vmem:[%s3 + $0x14] sm:$0xf]
  %v556 = vld [vmem:[%s3 + $0x18] sm:$0xf]
  %v557 = vld [vmem:[%s3 + $0x1c] sm:$0xf]
  %v558 = vld [vmem:[%s3 + $0x20] sm:$0xf]
  %v559 = vld [vmem:[%s3 + $0x24] sm:$0xf]
  %v560 = vld [vmem:[%s3 + $0x28] sm:$0xf]
  %v561 = vld [vmem:[%s3 + $0x2c] sm:$0xf]
  %v562 = vld [vmem:[%s3 + $0x30] sm:$0xf]
  %v563 = vld [vmem:[%s3 + $0x34] sm:$0xf]
  %v564 = vld [vmem:[%s3 + $0x38] sm:$0xf]
  %v565 = vld [vmem:[%s3 + $0x3c] sm:$0xf]
  %s566 = scalar_lea.vmem %s3, 64
  %v567 = vld [vmem:[%s566] sm:$0xf]
  %v568 = vld [vmem:[%s566 + $0x4] sm:$0xf]
  %v569 = vld [vmem:[%s566 + $0x8] sm:$0xf]
  %v570 = vld [vmem:[%s566 + $0xc] sm:$0xf]
  %v571 = vld [vmem:[%s566 + $0x10] sm:$0xf]
  %v572 = vld [vmem:[%s566 + $0x14] sm:$0xf]
  %v573 = vld [vmem:[%s566 + $0x18] sm:$0xf]
  %v574 = vld [vmem:[%s566 + $0x1c] sm:$0xf]
  %v575 = vld [vmem:[%s566 + $0x20] sm:$0xf]
  %v576 = vld [vmem:[%s566 + $0x24] sm:$0xf]
  %v577 = vld [vmem:[%s566 + $0x28] sm:$0xf]
  %v578 = vld [vmem:[%s566 + $0x2c] sm:$0xf]
  %v579 = vld [vmem:[%s566 + $0x30] sm:$0xf]
  %v580 = vld [vmem:[%s566 + $0x34] sm:$0xf]
  %v581 = vld [vmem:[%s566 + $0x38] sm:$0xf]
  %v582 = vld [vmem:[%s566 + $0x3c] sm:$0xf]
  %v585 = vunpack.c.l.b16 %v548
  %v586 = vunpack.c.l.b16 %v549
  %v587 = vrot.slane %v585, 1
  %vm588 = vcmask 1041409
  %v589 = vsel %vm588, %v586, %v587
  %v590 = vpack.c.b16 %v589, %v589
  %v608 = vunpack.c.l.b16 %v567
  %v609 = vunpack.c.l.b16 %v568
  %v610 = vunpack.c.l.b16 %v569
  %v611 = vunpack.c.l.b16 %v570
  %v612 = vunpack.c.l.b16 %v571
  %v613 = vunpack.c.l.b16 %v572
  %v614 = vunpack.c.l.b16 %v573
  %v615 = vunpack.c.l.b16 %v574
  %v616 = vunpack.c.l.b16 %v575
  %v617 = vunpack.c.l.b16 %v576
  %v618 = vunpack.c.l.b16 %v577
  %v619 = vunpack.c.l.b16 %v578
  %v620 = vunpack.c.l.b16 %v579
  %v621 = vunpack.c.l.b16 %v580
  %v622 = vunpack.c.l.b16 %v581
  %v623 = vunpack.c.l.b16 %v582
  %v624 = vpack.c.b16 %v609, %v608
  %v625 = vpack.c.b16 %v611, %v610
  %v626 = vpack.c.b16 %v613, %v612
  %v627 = vpack.c.b16 %v615, %v614
  %v628 = vpack.c.b16 %v617, %v616
  %v629 = vpack.c.b16 %v619, %v618
  %v630 = vpack.c.b16 %v621, %v620
  %v631 = vpack.c.b16 %v623, %v622
  %640 = vmatprep.subr.bf16.mxu0 0
  %641 = vmatpush1.bf16.msra.mxu0 %v631
  %642 = vmatprep.subr.bf16.mxu0 0
  %643 = vmatpush1.bf16.msra.mxu0 %v630
  %644 = vmatprep.subr.bf16.mxu0 0
  %645 = vmatpush1.bf16.msra.mxu0 %v629
  %646 = vmatprep.subr.bf16.mxu0 0
  %647 = vmatpush1.bf16.msra.mxu0 %v628
  %648 = vmatprep.subr.bf16.mxu0 0
  %649 = vmatpush1.bf16.msra.mxu0 %v627
  %650 = vmatprep.subr.bf16.mxu0 0
  %651 = vmatpush1.bf16.msra.mxu0 %v626
  %652 = vmatprep.subr.bf16.mxu0 0
  %653 = vmatpush1.bf16.msra.mxu0 %v625
  %654 = vmatprep.subr.bf16.mxu0 0
  %655 = vmatpush1.bf16.msra.mxu0 %v624
  %656 = vmatprep.subr.bf16.mxu0 0
  %657 = vmatpush2.bf16.msra.mxu0 0
  %658 = vmatprep.subr.bf16.mxu0 0
  %659 = vmatpush2.bf16.msra.mxu0 0
  %660 = vmatprep.subr.bf16.mxu0 0
  %661 = vmatpush2.bf16.msra.mxu0 0
  %662 = vmatprep.subr.bf16.mxu0 0
  %663 = vmatpush2.bf16.msra.mxu0 0
  %664 = vmatprep.subr.bf16.mxu0 0
  %665 = vmatpush2.bf16.msra.mxu0 0
  %666 = vmatprep.subr.bf16.mxu0 0
  %667 = vmatpush2.bf16.msra.mxu0 0
  %668 = vmatprep.subr.bf16.mxu0 0
  %669 = vmatpush2.bf16.msra.mxu0 0
  %670 = vmatprep.subr.bf16.mxu0 0
  %671 = vmatpush2.bf16.msra.mxu0 0
  %672 = vmatprep.mubr.bf16.mxu0 0
  %673 = vmatmul.mubr.bf16.gmra.mxu0 %v590
  %v674 = vpop.f32.mrf.mxu0
  %v675 = vadd.f32 0.0, %v674
  %v676 = vpop.f32.mrf.mxu0
  %v677 = vpop.f32.mrf.mxu0
  %v678 = vpop.f32.mrf.mxu0
  %679 = vdwg.mxu0
  %v680 = vrot.slane %v586, 7
  %v681 = vsel %vm588, %v680, %v585
  %v682 = vpack.c.b16 %v681, %v681
  %v700 = vunpack.c.l.b16 %v550
  %v701 = vunpack.c.l.b16 %v551
  %v702 = vunpack.c.l.b16 %v552
  %v703 = vunpack.c.l.b16 %v553
  %v704 = vunpack.c.l.b16 %v554
  %v705 = vunpack.c.l.b16 %v555
  %v706 = vunpack.c.l.b16 %v556
  %v707 = vunpack.c.l.b16 %v557
  %v708 = vunpack.c.l.b16 %v558
  %v709 = vunpack.c.l.b16 %v559
  %v710 = vunpack.c.l.b16 %v560
  %v711 = vunpack.c.l.b16 %v561
  %v712 = vunpack.c.l.b16 %v562
  %v713 = vunpack.c.l.b16 %v563
  %v714 = vunpack.c.l.b16 %v564
  %v715 = vunpack.c.l.b16 %v565
  %v716 = vpack.c.b16 %v701, %v700
  %v717 = vpack.c.b16 %v703, %v702
  %v718 = vpack.c.b16 %v705, %v704
  %v719 = vpack.c.b16 %v707, %v706
  %v720 = vpack.c.b16 %v709, %v708
  %v721 = vpack.c.b16 %v711, %v710
  %v722 = vpack.c.b16 %v713, %v712
  %v723 = vpack.c.b16 %v715, %v714
  %732 = vmatprep.subr.bf16.mxu0 0
  %733 = vmatpush1.bf16.msra.mxu0 %v723
  %734 = vmatprep.subr.bf16.mxu0 0
  %735 = vmatpush1.bf16.msra.mxu0 %v722
  %736 = vmatprep.subr.bf16.mxu0 0
  %737 = vmatpush1.bf16.msra.mxu0 %v721
  %738 = vmatprep.subr.bf16.mxu0 0
  %739 = vmatpush1.bf16.msra.mxu0 %v720
  %740 = vmatprep.subr.bf16.mxu0 0
  %741 = vmatpush1.bf16.msra.mxu0 %v719
  %742 = vmatprep.subr.bf16.mxu0 0
  %743 = vmatpush1.bf16.msra.mxu0 %v718
  %744 = vmatprep.subr.bf16.mxu0 0
  %745 = vmatpush1.bf16.msra.mxu0 %v717
  %746 = vmatprep.subr.bf16.mxu0 0
  %747 = vmatpush1.bf16.msra.mxu0 %v716
  %748 = vmatprep.subr.bf16.mxu0 0
  %749 = vmatpush2.bf16.msra.mxu0 0
  %750 = vmatprep.subr.bf16.mxu0 0
  %751 = vmatpush2.bf16.msra.mxu0 0
  %752 = vmatprep.subr.bf16.mxu0 0
  %753 = vmatpush2.bf16.msra.mxu0 0
  %754 = vmatprep.subr.bf16.mxu0 0
  %755 = vmatpush2.bf16.msra.mxu0 0
  %756 = vmatprep.subr.bf16.mxu0 0
  %757 = vmatpush2.bf16.msra.mxu0 0
  %758 = vmatprep.subr.bf16.mxu0 0
  %759 = vmatpush2.bf16.msra.mxu0 0
  %760 = vmatprep.subr.bf16.mxu0 0
  %761 = vmatpush2.bf16.msra.mxu0 0
  %762 = vmatprep.subr.bf16.mxu0 0
  %763 = vmatpush2.bf16.msra.mxu0 0
  %764 = vmatprep.mubr.bf16.mxu0 0
  %765 = vmatmul.mubr.bf16.gmra.mxu0 %v682
  %v766 = vpop.f32.mrf.mxu0
  %v767 = vadd.f32 %v675, %v766
  %v768 = vpop.f32.mrf.mxu0
  %v769 = vpop.f32.mrf.mxu0
  %v770 = vpop.f32.mrf.mxu0
  %771 = vdwg.mxu0
  %s772 = scalar_lea.vmem %s3, 128
  %v773 = vld [vmem:[%s772] sm:$0xf]
  %v774 = vld [vmem:[%s772 + $0x4] sm:$0xf]
  %v775 = vld [vmem:[%s772 + $0x8] sm:$0xf]
  %v776 = vld [vmem:[%s772 + $0xc] sm:$0xf]
  %v777 = vld [vmem:[%s772 + $0x10] sm:$0xf]
  %v778 = vld [vmem:[%s772 + $0x14] sm:$0xf]
  %v779 = vld [vmem:[%s772 + $0x18] sm:$0xf]
  %v780 = vld [vmem:[%s772 + $0x1c] sm:$0xf]
  %v781 = vld [vmem:[%s772 + $0x20] sm:$0xf]
  %v782 = vld [vmem:[%s772 + $0x24] sm:$0xf]
  %v783 = vld [vmem:[%s772 + $0x28] sm:$0xf]
  %v784 = vld [vmem:[%s772 + $0x2c] sm:$0xf]
  %v785 = vld [vmem:[%s772 + $0x30] sm:$0xf]
  %v786 = vld [vmem:[%s772 + $0x34] sm:$0xf]
  %v787 = vld [vmem:[%s772 + $0x38] sm:$0xf]
  %v788 = vld [vmem:[%s772 + $0x3c] sm:$0xf]
  %v789 = vrot.slane %v585, 2
  %v790 = vrot.slane %v586, 1
  %v791 = vsel %vm588, %v790, %v789
  %v792 = vpack.c.b16 %v791, %v791
  %v810 = vunpack.c.l.b16 %v773
  %v811 = vunpack.c.l.b16 %v774
  %v812 = vunpack.c.l.b16 %v775
  %v813 = vunpack.c.l.b16 %v776
  %v814 = vunpack.c.l.b16 %v777
  %v815 = vunpack.c.l.b16 %v778
  %v816 = vunpack.c.l.b16 %v779
  %v817 = vunpack.c.l.b16 %v780
  %v818 = vunpack.c.l.b16 %v781
  %v819 = vunpack.c.l.b16 %v782
  %v820 = vunpack.c.l.b16 %v783
  %v821 = vunpack.c.l.b16 %v784
  %v822 = vunpack.c.l.b16 %v785
  %v823 = vunpack.c.l.b16 %v786
  %v824 = vunpack.c.l.b16 %v787
  %v825 = vunpack.c.l.b16 %v788
  %v826 = vpack.c.b16 %v811, %v810
  %v827 = vpack.c.b16 %v813, %v812
  %v828 = vpack.c.b16 %v815, %v814
  %v829 = vpack.c.b16 %v817, %v816
  %v830 = vpack.c.b16 %v819, %v818
  %v831 = vpack.c.b16 %v821, %v820
  %v832 = vpack.c.b16 %v823, %v822
  %v833 = vpack.c.b16 %v825, %v824
  %842 = vmatprep.subr.bf16.mxu0 0
  %843 = vmatpush1.bf16.msra.mxu0 %v833
  %844 = vmatprep.subr.bf16.mxu0 0
  %845 = vmatpush1.bf16.msra.mxu0 %v832
  %846 = vmatprep.subr.bf16.mxu0 0
  %847 = vmatpush1.bf16.msra.mxu0 %v831
  %848 = vmatprep.subr.bf16.mxu0 0
  %849 = vmatpush1.bf16.msra.mxu0 %v830
  %850 = vmatprep.subr.bf16.mxu0 0
  %851 = vmatpush1.bf16.msra.mxu0 %v829
  %852 = vmatprep.subr.bf16.mxu0 0
  %853 = vmatpush1.bf16.msra.mxu0 %v828
  %854 = vmatprep.subr.bf16.mxu0 0
  %855 = vmatpush1.bf16.msra.mxu0 %v827
  %856 = vmatprep.subr.bf16.mxu0 0
  %857 = vmatpush1.bf16.msra.mxu0 %v826
  %858 = vmatprep.subr.bf16.mxu0 0
  %859 = vmatpush2.bf16.msra.mxu0 0
  %860 = vmatprep.subr.bf16.mxu0 0
  %861 = vmatpush2.bf16.msra.mxu0 0
  %862 = vmatprep.subr.bf16.mxu0 0
  %863 = vmatpush2.bf16.msra.mxu0 0
  %864 = vmatprep.subr.bf16.mxu0 0
  %865 = vmatpush2.bf16.msra.mxu0 0
  %866 = vmatprep.subr.bf16.mxu0 0
  %867 = vmatpush2.bf16.msra.mxu0 0
  %868 = vmatprep.subr.bf16.mxu0 0
  %869 = vmatpush2.bf16.msra.mxu0 0
  %870 = vmatprep.subr.bf16.mxu0 0
  %871 = vmatpush2.bf16.msra.mxu0 0
  %872 = vmatprep.subr.bf16.mxu0 0
  %873 = vmatpush2.bf16.msra.mxu0 0
  %874 = vmatprep.mubr.bf16.mxu0 0
  %875 = vmatmul.mubr.bf16.gmra.mxu0 %v792
  %v876 = vpop.f32.mrf.mxu0
  %v877 = vadd.f32 0.0, %v876
  %v878 = vpop.f32.mrf.mxu0
  %v879 = vpop.f32.mrf.mxu0
  %v880 = vpop.f32.mrf.mxu0
  %881 = vdwg.mxu0
  %v882 = vadd.f32 %v767, %v877
  %s883 = scalar_lea.vmem %s3, 192
  %v884 = vld [vmem:[%s883] sm:$0xf]
  %v885 = vld [vmem:[%s883 + $0x4] sm:$0xf]
  %v886 = vld [vmem:[%s883 + $0x8] sm:$0xf]
  %v887 = vld [vmem:[%s883 + $0xc] sm:$0xf]
  %v888 = vld [vmem:[%s883 + $0x10] sm:$0xf]
  %v889 = vld [vmem:[%s883 + $0x14] sm:$0xf]
  %v890 = vld [vmem:[%s883 + $0x18] sm:$0xf]
  %v891 = vld [vmem:[%s883 + $0x1c] sm:$0xf]
  %v892 = vld [vmem:[%s883 + $0x20] sm:$0xf]
  %v893 = vld [vmem:[%s883 + $0x24] sm:$0xf]
  %v894 = vld [vmem:[%s883 + $0x28] sm:$0xf]
  %v895 = vld [vmem:[%s883 + $0x2c] sm:$0xf]
  %v896 = vld [vmem:[%s883 + $0x30] sm:$0xf]
  %v897 = vld [vmem:[%s883 + $0x34] sm:$0xf]
  %v898 = vld [vmem:[%s883 + $0x38] sm:$0xf]
  %v899 = vld [vmem:[%s883 + $0x3c] sm:$0xf]
  %v900 = vrot.slane %v585, 3
  %v901 = vrot.slane %v586, 2
  %v902 = vsel %vm588, %v901, %v900
  %v903 = vpack.c.b16 %v902, %v902
  %v921 = vunpack.c.l.b16 %v884
  %v922 = vunpack.c.l.b16 %v885
  %v923 = vunpack.c.l.b16 %v886
  %v924 = vunpack.c.l.b16 %v887
  %v925 = vunpack.c.l.b16 %v888
  %v926 = vunpack.c.l.b16 %v889
  %v927 = vunpack.c.l.b16 %v890
  %v928 = vunpack.c.l.b16 %v891
  %v929 = vunpack.c.l.b16 %v892
  %v930 = vunpack.c.l.b16 %v893
  %v931 = vunpack.c.l.b16 %v894
  %v932 = vunpack.c.l.b16 %v895
  %v933 = vunpack.c.l.b16 %v896
  %v934 = vunpack.c.l.b16 %v897
  %v935 = vunpack.c.l.b16 %v898
  %v936 = vunpack.c.l.b16 %v899
  %v937 = vpack.c.b16 %v922, %v921
  %v938 = vpack.c.b16 %v924, %v923
  %v939 = vpack.c.b16 %v926, %v925
  %v940 = vpack.c.b16 %v928, %v927
  %v941 = vpack.c.b16 %v930, %v929
  %v942 = vpack.c.b16 %v932, %v931
  %v943 = vpack.c.b16 %v934, %v933
  %v944 = vpack.c.b16 %v936, %v935
  %953 = vmatprep.subr.bf16.mxu0 0
  %954 = vmatpush1.bf16.msra.mxu0 %v944
  %955 = vmatprep.subr.bf16.mxu0 0
  %956 = vmatpush1.bf16.msra.mxu0 %v943
  %957 = vmatprep.subr.bf16.mxu0 0
  %958 = vmatpush1.bf16.msra.mxu0 %v942
  %959 = vmatprep.subr.bf16.mxu0 0
  %960 = vmatpush1.bf16.msra.mxu0 %v941
  %961 = vmatprep.subr.bf16.mxu0 0
  %962 = vmatpush1.bf16.msra.mxu0 %v940
  %963 = vmatprep.subr.bf16.mxu0 0
  %964 = vmatpush1.bf16.msra.mxu0 %v939
  %965 = vmatprep.subr.bf16.mxu0 0
  %966 = vmatpush1.bf16.msra.mxu0 %v938
  %967 = vmatprep.subr.bf16.mxu0 0
  %968 = vmatpush1.bf16.msra.mxu0 %v937
  %969 = vmatprep.subr.bf16.mxu0 0
  %970 = vmatpush2.bf16.msra.mxu0 0
  %971 = vmatprep.subr.bf16.mxu0 0
  %972 = vmatpush2.bf16.msra.mxu0 0
  %973 = vmatprep.subr.bf16.mxu0 0
  %974 = vmatpush2.bf16.msra.mxu0 0
  %975 = vmatprep.subr.bf16.mxu0 0
  %976 = vmatpush2.bf16.msra.mxu0 0
  %977 = vmatprep.subr.bf16.mxu0 0
  %978 = vmatpush2.bf16.msra.mxu0 0
  %979 = vmatprep.subr.bf16.mxu0 0
  %980 = vmatpush2.bf16.msra.mxu0 0
  %981 = vmatprep.subr.bf16.mxu0 0
  %982 = vmatpush2.bf16.msra.mxu0 0
  %983 = vmatprep.subr.bf16.mxu0 0
  %984 = vmatpush2.bf16.msra.mxu0 0
  %985 = vmatprep.mubr.bf16.mxu0 0
  %986 = vmatmul.mubr.bf16.gmra.mxu0 %v903
  %v987 = vpop.f32.mrf.mxu0
  %v988 = vadd.f32 0.0, %v987
  %v989 = vpop.f32.mrf.mxu0
  %v990 = vpop.f32.mrf.mxu0
  %v991 = vpop.f32.mrf.mxu0
  %992 = vdwg.mxu0
  %v993 = vadd.f32 %v882, %v988
  %s994 = scalar_lea.vmem %s3, 256
  %v995 = vld [vmem:[%s994] sm:$0xf]
  %v996 = vld [vmem:[%s994 + $0x4] sm:$0xf]
  %v997 = vld [vmem:[%s994 + $0x8] sm:$0xf]
  %v998 = vld [vmem:[%s994 + $0xc] sm:$0xf]
  %v999 = vld [vmem:[%s994 + $0x10] sm:$0xf]
  %v1000 = vld [vmem:[%s994 + $0x14] sm:$0xf]
  %v1001 = vld [vmem:[%s994 + $0x18] sm:$0xf]
  %v1002 = vld [vmem:[%s994 + $0x1c] sm:$0xf]
  %v1003 = vld [vmem:[%s994 + $0x20] sm:$0xf]
  %v1004 = vld [vmem:[%s994 + $0x24] sm:$0xf]
  %v1005 = vld [vmem:[%s994 + $0x28] sm:$0xf]
  %v1006 = vld [vmem:[%s994 + $0x2c] sm:$0xf]
  %v1007 = vld [vmem:[%s994 + $0x30] sm:$0xf]
  %v1008 = vld [vmem:[%s994 + $0x34] sm:$0xf]
  %v1009 = vld [vmem:[%s994 + $0x38] sm:$0xf]
  %v1010 = vld [vmem:[%s994 + $0x3c] sm:$0xf]
  %v1011 = vrot.slane %v585, 4
  %v1012 = vrot.slane %v586, 3
  %v1013 = vsel %vm588, %v1012, %v1011
  %v1014 = vpack.c.b16 %v1013, %v1013
  %v1032 = vunpack.c.l.b16 %v995
  %v1033 = vunpack.c.l.b16 %v996
  %v1034 = vunpack.c.l.b16 %v997
  %v1035 = vunpack.c.l.b16 %v998
  %v1036 = vunpack.c.l.b16 %v999
  %v1037 = vunpack.c.l.b16 %v1000
  %v1038 = vunpack.c.l.b16 %v1001
  %v1039 = vunpack.c.l.b16 %v1002
  %v1040 = vunpack.c.l.b16 %v1003
  %v1041 = vunpack.c.l.b16 %v1004
  %v1042 = vunpack.c.l.b16 %v1005
  %v1043 = vunpack.c.l.b16 %v1006
  %v1044 = vunpack.c.l.b16 %v1007
  %v1045 = vunpack.c.l.b16 %v1008
  %v1046 = vunpack.c.l.b16 %v1009
  %v1047 = vunpack.c.l.b16 %v1010
  %v1048 = vpack.c.b16 %v1033, %v1032
  %v1049 = vpack.c.b16 %v1035, %v1034
  %v1050 = vpack.c.b16 %v1037, %v1036
  %v1051 = vpack.c.b16 %v1039, %v1038
  %v1052 = vpack.c.b16 %v1041, %v1040
  %v1053 = vpack.c.b16 %v1043, %v1042
  %v1054 = vpack.c.b16 %v1045, %v1044
  %v1055 = vpack.c.b16 %v1047, %v1046
  %1064 = vmatprep.subr.bf16.mxu0 0
  %1065 = vmatpush1.bf16.msra.mxu0 %v1055
  %1066 = vmatprep.subr.bf16.mxu0 0
  %1067 = vmatpush1.bf16.msra.mxu0 %v1054
  %1068 = vmatprep.subr.bf16.mxu0 0
  %1069 = vmatpush1.bf16.msra.mxu0 %v1053
  %1070 = vmatprep.subr.bf16.mxu0 0
  %1071 = vmatpush1.bf16.msra.mxu0 %v1052
  %1072 = vmatprep.subr.bf16.mxu0 0
  %1073 = vmatpush1.bf16.msra.mxu0 %v1051
  %1074 = vmatprep.subr.bf16.mxu0 0
  %1075 = vmatpush1.bf16.msra.mxu0 %v1050
  %1076 = vmatprep.subr.bf16.mxu0 0
  %1077 = vmatpush1.bf16.msra.mxu0 %v1049
  %1078 = vmatprep.subr.bf16.mxu0 0
  %1079 = vmatpush1.bf16.msra.mxu0 %v1048
  %1080 = vmatprep.subr.bf16.mxu0 0
  %1081 = vmatpush2.bf16.msra.mxu0 0
  %1082 = vmatprep.subr.bf16.mxu0 0
  %1083 = vmatpush2.bf16.msra.mxu0 0
  %1084 = vmatprep.subr.bf16.mxu0 0
  %1085 = vmatpush2.bf16.msra.mxu0 0
  %1086 = vmatprep.subr.bf16.mxu0 0
  %1087 = vmatpush2.bf16.msra.mxu0 0
  %1088 = vmatprep.subr.bf16.mxu0 0
  %1089 = vmatpush2.bf16.msra.mxu0 0
  %1090 = vmatprep.subr.bf16.mxu0 0
  %1091 = vmatpush2.bf16.msra.mxu0 0
  %1092 = vmatprep.subr.bf16.mxu0 0
  %1093 = vmatpush2.bf16.msra.mxu0 0
  %1094 = vmatprep.subr.bf16.mxu0 0
  %1095 = vmatpush2.bf16.msra.mxu0 0
  %1096 = vmatprep.mubr.bf16.mxu0 0
  %1097 = vmatmul.mubr.bf16.gmra.mxu0 %v1014
  %v1098 = vpop.f32.mrf.mxu0
  %v1099 = vadd.f32 0.0, %v1098
  %v1100 = vpop.f32.mrf.mxu0
  %v1101 = vpop.f32.mrf.mxu0
  %v1102 = vpop.f32.mrf.mxu0
  %1103 = vdwg.mxu0
  %v1104 = vadd.f32 %v993, %v1099
  %s1105 = scalar_lea.vmem %s3, 320
  %v1106 = vld [vmem:[%s1105] sm:$0xf]
  %v1107 = vld [vmem:[%s1105 + $0x4] sm:$0xf]
  %v1108 = vld [vmem:[%s1105 + $0x8] sm:$0xf]
  %v1109 = vld [vmem:[%s1105 + $0xc] sm:$0xf]
  %v1110 = vld [vmem:[%s1105 + $0x10] sm:$0xf]
  %v1111 = vld [vmem:[%s1105 + $0x14] sm:$0xf]
  %v1112 = vld [vmem:[%s1105 + $0x18] sm:$0xf]
  %v1113 = vld [vmem:[%s1105 + $0x1c] sm:$0xf]
  %v1114 = vld [vmem:[%s1105 + $0x20] sm:$0xf]
  %v1115 = vld [vmem:[%s1105 + $0x24] sm:$0xf]
  %v1116 = vld [vmem:[%s1105 + $0x28] sm:$0xf]
  %v1117 = vld [vmem:[%s1105 + $0x2c] sm:$0xf]
  %v1118 = vld [vmem:[%s1105 + $0x30] sm:$0xf]
  %v1119 = vld [vmem:[%s1105 + $0x34] sm:$0xf]
  %v1120 = vld [vmem:[%s1105 + $0x38] sm:$0xf]
  %v1121 = vld [vmem:[%s1105 + $0x3c] sm:$0xf]
  %v1122 = vrot.slane %v585, 5
  %v1123 = vrot.slane %v586, 4
  %v1124 = vsel %vm588, %v1123, %v1122
  %v1125 = vpack.c.b16 %v1124, %v1124
  %v1143 = vunpack.c.l.b16 %v1106
  %v1144 = vunpack.c.l.b16 %v1107
  %v1145 = vunpack.c.l.b16 %v1108
  %v1146 = vunpack.c.l.b16 %v1109
  %v1147 = vunpack.c.l.b16 %v1110
  %v1148 = vunpack.c.l.b16 %v1111
  %v1149 = vunpack.c.l.b16 %v1112
  %v1150 = vunpack.c.l.b16 %v1113
  %v1151 = vunpack.c.l.b16 %v1114
  %v1152 = vunpack.c.l.b16 %v1115
  %v1153 = vunpack.c.l.b16 %v1116
  %v1154 = vunpack.c.l.b16 %v1117
  %v1155 = vunpack.c.l.b16 %v1118
  %v1156 = vunpack.c.l.b16 %v1119
  %v1157 = vunpack.c.l.b16 %v1120
  %v1158 = vunpack.c.l.b16 %v1121
  %v1159 = vpack.c.b16 %v1144, %v1143
  %v1160 = vpack.c.b16 %v1146, %v1145
  %v1161 = vpack.c.b16 %v1148, %v1147
  %v1162 = vpack.c.b16 %v1150, %v1149
  %v1163 = vpack.c.b16 %v1152, %v1151
  %v1164 = vpack.c.b16 %v1154, %v1153
  %v1165 = vpack.c.b16 %v1156, %v1155
  %v1166 = vpack.c.b16 %v1158, %v1157
  %1175 = vmatprep.subr.bf16.mxu0 0
  %1176 = vmatpush1.bf16.msra.mxu0 %v1166
  %1177 = vmatprep.subr.bf16.mxu0 0
  %1178 = vmatpush1.bf16.msra.mxu0 %v1165
  %1179 = vmatprep.subr.bf16.mxu0 0
  %1180 = vmatpush1.bf16.msra.mxu0 %v1164
  %1181 = vmatprep.subr.bf16.mxu0 0
  %1182 = vmatpush1.bf16.msra.mxu0 %v1163
  %1183 = vmatprep.subr.bf16.mxu0 0
  %1184 = vmatpush1.bf16.msra.mxu0 %v1162
  %1185 = vmatprep.subr.bf16.mxu0 0
  %1186 = vmatpush1.bf16.msra.mxu0 %v1161
  %1187 = vmatprep.subr.bf16.mxu0 0
  %1188 = vmatpush1.bf16.msra.mxu0 %v1160
  %1189 = vmatprep.subr.bf16.mxu0 0
  %1190 = vmatpush1.bf16.msra.mxu0 %v1159
  %1191 = vmatprep.subr.bf16.mxu0 0
  %1192 = vmatpush2.bf16.msra.mxu0 0
  %1193 = vmatprep.subr.bf16.mxu0 0
  %1194 = vmatpush2.bf16.msra.mxu0 0
  %1195 = vmatprep.subr.bf16.mxu0 0
  %1196 = vmatpush2.bf16.msra.mxu0 0
  %1197 = vmatprep.subr.bf16.mxu0 0
  %1198 = vmatpush2.bf16.msra.mxu0 0
  %1199 = vmatprep.subr.bf16.mxu0 0
  %1200 = vmatpush2.bf16.msra.mxu0 0
  %1201 = vmatprep.subr.bf16.mxu0 0
  %1202 = vmatpush2.bf16.msra.mxu0 0
  %1203 = vmatprep.subr.bf16.mxu0 0
  %1204 = vmatpush2.bf16.msra.mxu0 0
  %1205 = vmatprep.subr.bf16.mxu0 0
  %1206 = vmatpush2.bf16.msra.mxu0 0
  %1207 = vmatprep.mubr.bf16.mxu0 0
  %1208 = vmatmul.mubr.bf16.gmra.mxu0 %v1125
  %v1209 = vpop.f32.mrf.mxu0
  %v1210 = vadd.f32 0.0, %v1209
  %v1211 = vpop.f32.mrf.mxu0
  %v1212 = vpop.f32.mrf.mxu0
  %v1213 = vpop.f32.mrf.mxu0
  %1214 = vdwg.mxu0
  %v1215 = vadd.f32 %v1104, %v1210
  %s1216 = scalar_lea.vmem %s3, 384
  %v1217 = vld [vmem:[%s1216] sm:$0xf]
  %v1218 = vld [vmem:[%s1216 + $0x4] sm:$0xf]
  %v1219 = vld [vmem:[%s1216 + $0x8] sm:$0xf]
  %v1220 = vld [vmem:[%s1216 + $0xc] sm:$0xf]
  %v1221 = vld [vmem:[%s1216 + $0x10] sm:$0xf]
  %v1222 = vld [vmem:[%s1216 + $0x14] sm:$0xf]
  %v1223 = vld [vmem:[%s1216 + $0x18] sm:$0xf]
  %v1224 = vld [vmem:[%s1216 + $0x1c] sm:$0xf]
  %v1225 = vld [vmem:[%s1216 + $0x20] sm:$0xf]
  %v1226 = vld [vmem:[%s1216 + $0x24] sm:$0xf]
  %v1227 = vld [vmem:[%s1216 + $0x28] sm:$0xf]
  %v1228 = vld [vmem:[%s1216 + $0x2c] sm:$0xf]
  %v1229 = vld [vmem:[%s1216 + $0x30] sm:$0xf]
  %v1230 = vld [vmem:[%s1216 + $0x34] sm:$0xf]
  %v1231 = vld [vmem:[%s1216 + $0x38] sm:$0xf]
  %v1232 = vld [vmem:[%s1216 + $0x3c] sm:$0xf]
  %v1233 = vrot.slane %v585, 6
  %v1234 = vrot.slane %v586, 5
  %v1235 = vsel %vm588, %v1234, %v1233
  %v1236 = vpack.c.b16 %v1235, %v1235
  %v1254 = vunpack.c.l.b16 %v1217
  %v1255 = vunpack.c.l.b16 %v1218
  %v1256 = vunpack.c.l.b16 %v1219
  %v1257 = vunpack.c.l.b16 %v1220
  %v1258 = vunpack.c.l.b16 %v1221
  %v1259 = vunpack.c.l.b16 %v1222
  %v1260 = vunpack.c.l.b16 %v1223
  %v1261 = vunpack.c.l.b16 %v1224
  %v1262 = vunpack.c.l.b16 %v1225
  %v1263 = vunpack.c.l.b16 %v1226
  %v1264 = vunpack.c.l.b16 %v1227
  %v1265 = vunpack.c.l.b16 %v1228
  %v1266 = vunpack.c.l.b16 %v1229
  %v1267 = vunpack.c.l.b16 %v1230
  %v1268 = vunpack.c.l.b16 %v1231
  %v1269 = vunpack.c.l.b16 %v1232
  %v1270 = vpack.c.b16 %v1255, %v1254
  %v1271 = vpack.c.b16 %v1257, %v1256
  %v1272 = vpack.c.b16 %v1259, %v1258
  %v1273 = vpack.c.b16 %v1261, %v1260
  %v1274 = vpack.c.b16 %v1263, %v1262
  %v1275 = vpack.c.b16 %v1265, %v1264
  %v1276 = vpack.c.b16 %v1267, %v1266
  %v1277 = vpack.c.b16 %v1269, %v1268
  %1286 = vmatprep.subr.bf16.mxu0 0
  %1287 = vmatpush1.bf16.msra.mxu0 %v1277
  %1288 = vmatprep.subr.bf16.mxu0 0
  %1289 = vmatpush1.bf16.msra.mxu0 %v1276
  %1290 = vmatprep.subr.bf16.mxu0 0
  %1291 = vmatpush1.bf16.msra.mxu0 %v1275
  %1292 = vmatprep.subr.bf16.mxu0 0
  %1293 = vmatpush1.bf16.msra.mxu0 %v1274
  %1294 = vmatprep.subr.bf16.mxu0 0
  %1295 = vmatpush1.bf16.msra.mxu0 %v1273
  %1296 = vmatprep.subr.bf16.mxu0 0
  %1297 = vmatpush1.bf16.msra.mxu0 %v1272
  %1298 = vmatprep.subr.bf16.mxu0 0
  %1299 = vmatpush1.bf16.msra.mxu0 %v1271
  %1300 = vmatprep.subr.bf16.mxu0 0
  %1301 = vmatpush1.bf16.msra.mxu0 %v1270
  %1302 = vmatprep.subr.bf16.mxu0 0
  %1303 = vmatpush2.bf16.msra.mxu0 0
  %1304 = vmatprep.subr.bf16.mxu0 0
  %1305 = vmatpush2.bf16.msra.mxu0 0
  %1306 = vmatprep.subr.bf16.mxu0 0
  %1307 = vmatpush2.bf16.msra.mxu0 0
  %1308 = vmatprep.subr.bf16.mxu0 0
  %1309 = vmatpush2.bf16.msra.mxu0 0
  %1310 = vmatprep.subr.bf16.mxu0 0
  %1311 = vmatpush2.bf16.msra.mxu0 0
  %1312 = vmatprep.subr.bf16.mxu0 0
  %1313 = vmatpush2.bf16.msra.mxu0 0
  %1314 = vmatprep.subr.bf16.mxu0 0
  %1315 = vmatpush2.bf16.msra.mxu0 0
  %1316 = vmatprep.subr.bf16.mxu0 0
  %1317 = vmatpush2.bf16.msra.mxu0 0
  %1318 = vmatprep.mubr.bf16.mxu0 0
  %1319 = vmatmul.mubr.bf16.gmra.mxu0 %v1236
  %v1320 = vpop.f32.mrf.mxu0
  %v1321 = vadd.f32 0.0, %v1320
  %v1322 = vpop.f32.mrf.mxu0
  %v1323 = vpop.f32.mrf.mxu0
  %v1324 = vpop.f32.mrf.mxu0
  %1325 = vdwg.mxu0
  %v1326 = vadd.f32 %v1215, %v1321
  %s1327 = scalar_lea.vmem %s3, 448
  %v1328 = vld [vmem:[%s1327] sm:$0xf]
  %v1329 = vld [vmem:[%s1327 + $0x4] sm:$0xf]
  %v1330 = vld [vmem:[%s1327 + $0x8] sm:$0xf]
  %v1331 = vld [vmem:[%s1327 + $0xc] sm:$0xf]
  %v1332 = vld [vmem:[%s1327 + $0x10] sm:$0xf]
  %v1333 = vld [vmem:[%s1327 + $0x14] sm:$0xf]
  %v1334 = vld [vmem:[%s1327 + $0x18] sm:$0xf]
  %v1335 = vld [vmem:[%s1327 + $0x1c] sm:$0xf]
  %v1336 = vld [vmem:[%s1327 + $0x20] sm:$0xf]
  %v1337 = vld [vmem:[%s1327 + $0x24] sm:$0xf]
  %v1338 = vld [vmem:[%s1327 + $0x28] sm:$0xf]
  %v1339 = vld [vmem:[%s1327 + $0x2c] sm:$0xf]
  %v1340 = vld [vmem:[%s1327 + $0x30] sm:$0xf]
  %v1341 = vld [vmem:[%s1327 + $0x34] sm:$0xf]
  %v1342 = vld [vmem:[%s1327 + $0x38] sm:$0xf]
  %v1343 = vld [vmem:[%s1327 + $0x3c] sm:$0xf]
  %v1344 = vrot.slane %v585, 7
  %v1345 = vrot.slane %v586, 6
  %v1346 = vsel %vm588, %v1345, %v1344
  %v1347 = vpack.c.b16 %v1346, %v1346
  %v1365 = vunpack.c.l.b16 %v1328
  %v1366 = vunpack.c.l.b16 %v1329
  %v1367 = vunpack.c.l.b16 %v1330
  %v1368 = vunpack.c.l.b16 %v1331
  %v1369 = vunpack.c.l.b16 %v1332
  %v1370 = vunpack.c.l.b16 %v1333
  %v1371 = vunpack.c.l.b16 %v1334
  %v1372 = vunpack.c.l.b16 %v1335
  %v1373 = vunpack.c.l.b16 %v1336
  %v1374 = vunpack.c.l.b16 %v1337
  %v1375 = vunpack.c.l.b16 %v1338
  %v1376 = vunpack.c.l.b16 %v1339
  %v1377 = vunpack.c.l.b16 %v1340
  %v1378 = vunpack.c.l.b16 %v1341
  %v1379 = vunpack.c.l.b16 %v1342
  %v1380 = vunpack.c.l.b16 %v1343
  %v1381 = vpack.c.b16 %v1366, %v1365
  %v1382 = vpack.c.b16 %v1368, %v1367
  %v1383 = vpack.c.b16 %v1370, %v1369
  %v1384 = vpack.c.b16 %v1372, %v1371
  %v1385 = vpack.c.b16 %v1374, %v1373
  %v1386 = vpack.c.b16 %v1376, %v1375
  %v1387 = vpack.c.b16 %v1378, %v1377
  %v1388 = vpack.c.b16 %v1380, %v1379
  %1397 = vmatprep.subr.bf16.mxu0 0
  %1398 = vmatpush1.bf16.msra.mxu0 %v1388
  %1399 = vmatprep.subr.bf16.mxu0 0
  %1400 = vmatpush1.bf16.msra.mxu0 %v1387
  %1401 = vmatprep.subr.bf16.mxu0 0
  %1402 = vmatpush1.bf16.msra.mxu0 %v1386
  %1403 = vmatprep.subr.bf16.mxu0 0
  %1404 = vmatpush1.bf16.msra.mxu0 %v1385
  %1405 = vmatprep.subr.bf16.mxu0 0
  %1406 = vmatpush1.bf16.msra.mxu0 %v1384
  %1407 = vmatprep.subr.bf16.mxu0 0
  %1408 = vmatpush1.bf16.msra.mxu0 %v1383
  %1409 = vmatprep.subr.bf16.mxu0 0
  %1410 = vmatpush1.bf16.msra.mxu0 %v1382
  %1411 = vmatprep.subr.bf16.mxu0 0
  %1412 = vmatpush1.bf16.msra.mxu0 %v1381
  %1413 = vmatprep.subr.bf16.mxu0 0
  %1414 = vmatpush2.bf16.msra.mxu0 0
  %1415 = vmatprep.subr.bf16.mxu0 0
  %1416 = vmatpush2.bf16.msra.mxu0 0
  %1417 = vmatprep.subr.bf16.mxu0 0
  %1418 = vmatpush2.bf16.msra.mxu0 0
  %1419 = vmatprep.subr.bf16.mxu0 0
  %1420 = vmatpush2.bf16.msra.mxu0 0
  %1421 = vmatprep.subr.bf16.mxu0 0
  %1422 = vmatpush2.bf16.msra.mxu0 0
  %1423 = vmatprep.subr.bf16.mxu0 0
  %1424 = vmatpush2.bf16.msra.mxu0 0
  %1425 = vmatprep.subr.bf16.mxu0 0
  %1426 = vmatpush2.bf16.msra.mxu0 0
  %1427 = vmatprep.subr.bf16.mxu0 0
  %1428 = vmatpush2.bf16.msra.mxu0 0
  %1429 = vmatprep.mubr.bf16.mxu0 0
  %1430 = vmatmul.mubr.bf16.gmra.mxu0 %v1347
  %v1431 = vpop.f32.mrf.mxu0
  %v1432 = vadd.f32 0.0, %v1431
  %v1433 = vpop.f32.mrf.mxu0
  %v1434 = vpop.f32.mrf.mxu0
  %v1435 = vpop.f32.mrf.mxu0
  %1436 = vdwg.mxu0
  %v1437 = vadd.f32 %v1326, %v1432
  %v1438 = vpack.c.bf16 %v545, %v545
  %v1439 = vpack.c.bf16 %v547, %v547
  %s1440 = scalar_lea.vmem %s3, 512
  %v1441 = vld [vmem:[%s1440] sm:$0xf]
  %v1442 = vld [vmem:[%s1440 + $0x4] sm:$0xf]
  %v1443 = vld [vmem:[%s1440 + $0x8] sm:$0xf]
  %v1444 = vld [vmem:[%s1440 + $0xc] sm:$0xf]
  %v1445 = vld [vmem:[%s1440 + $0x10] sm:$0xf]
  %v1446 = vld [vmem:[%s1440 + $0x14] sm:$0xf]
  %v1447 = vld [vmem:[%s1440 + $0x18] sm:$0xf]
  %v1448 = vld [vmem:[%s1440 + $0x1c] sm:$0xf]
  %v1449 = vld [vmem:[%s1440 + $0x20] sm:$0xf]
  %v1450 = vld [vmem:[%s1440 + $0x24] sm:$0xf]
  %v1451 = vld [vmem:[%s1440 + $0x28] sm:$0xf]
  %v1452 = vld [vmem:[%s1440 + $0x2c] sm:$0xf]
  %v1453 = vld [vmem:[%s1440 + $0x30] sm:$0xf]
  %v1454 = vld [vmem:[%s1440 + $0x34] sm:$0xf]
  %v1455 = vld [vmem:[%s1440 + $0x38] sm:$0xf]
  %v1456 = vld [vmem:[%s1440 + $0x3c] sm:$0xf]
  %v1459 = vunpack.c.l.b16 %v1438
  %v1460 = vunpack.c.l.b16 %v1439
  %v1461 = vrot.slane %v1460, 7
  %v1462 = vsel %vm588, %v1461, %v1459
  %v1463 = vpack.c.b16 %v1462, %v1462
  %v1481 = vunpack.c.l.b16 %v1441
  %v1482 = vunpack.c.l.b16 %v1442
  %v1483 = vunpack.c.l.b16 %v1443
  %v1484 = vunpack.c.l.b16 %v1444
  %v1485 = vunpack.c.l.b16 %v1445
  %v1486 = vunpack.c.l.b16 %v1446
  %v1487 = vunpack.c.l.b16 %v1447
  %v1488 = vunpack.c.l.b16 %v1448
  %v1489 = vunpack.c.l.b16 %v1449
  %v1490 = vunpack.c.l.b16 %v1450
  %v1491 = vunpack.c.l.b16 %v1451
  %v1492 = vunpack.c.l.b16 %v1452
  %v1493 = vunpack.c.l.b16 %v1453
  %v1494 = vunpack.c.l.b16 %v1454
  %v1495 = vunpack.c.l.b16 %v1455
  %v1496 = vunpack.c.l.b16 %v1456
  %v1497 = vpack.c.b16 %v1482, %v1481
  %v1498 = vpack.c.b16 %v1484, %v1483
  %v1499 = vpack.c.b16 %v1486, %v1485
  %v1500 = vpack.c.b16 %v1488, %v1487
  %v1501 = vpack.c.b16 %v1490, %v1489
  %v1502 = vpack.c.b16 %v1492, %v1491
  %v1503 = vpack.c.b16 %v1494, %v1493
  %v1504 = vpack.c.b16 %v1496, %v1495
  %1513 = vmatprep.subr.bf16.mxu0 0
  %1514 = vmatpush1.bf16.msra.mxu0 %v1504
  %1515 = vmatprep.subr.bf16.mxu0 0
  %1516 = vmatpush1.bf16.msra.mxu0 %v1503
  %1517 = vmatprep.subr.bf16.mxu0 0
  %1518 = vmatpush1.bf16.msra.mxu0 %v1502
  %1519 = vmatprep.subr.bf16.mxu0 0
  %1520 = vmatpush1.bf16.msra.mxu0 %v1501
  %1521 = vmatprep.subr.bf16.mxu0 0
  %1522 = vmatpush1.bf16.msra.mxu0 %v1500
  %1523 = vmatprep.subr.bf16.mxu0 0
  %1524 = vmatpush1.bf16.msra.mxu0 %v1499
  %1525 = vmatprep.subr.bf16.mxu0 0
  %1526 = vmatpush1.bf16.msra.mxu0 %v1498
  %1527 = vmatprep.subr.bf16.mxu0 0
  %1528 = vmatpush1.bf16.msra.mxu0 %v1497
  %1529 = vmatprep.subr.bf16.mxu0 0
  %1530 = vmatpush2.bf16.msra.mxu0 0
  %1531 = vmatprep.subr.bf16.mxu0 0
  %1532 = vmatpush2.bf16.msra.mxu0 0
  %1533 = vmatprep.subr.bf16.mxu0 0
  %1534 = vmatpush2.bf16.msra.mxu0 0
  %1535 = vmatprep.subr.bf16.mxu0 0
  %1536 = vmatpush2.bf16.msra.mxu0 0
  %1537 = vmatprep.subr.bf16.mxu0 0
  %1538 = vmatpush2.bf16.msra.mxu0 0
  %1539 = vmatprep.subr.bf16.mxu0 0
  %1540 = vmatpush2.bf16.msra.mxu0 0
  %1541 = vmatprep.subr.bf16.mxu0 0
  %1542 = vmatpush2.bf16.msra.mxu0 0
  %1543 = vmatprep.subr.bf16.mxu0 0
  %1544 = vmatpush2.bf16.msra.mxu0 0
  %1545 = vmatprep.mubr.bf16.mxu0 0
  %1546 = vmatmul.mubr.bf16.gmra.mxu0 %v1463
  %v1547 = vpop.f32.mrf.mxu0
  %v1548 = vadd.f32 0.0, %v1547
  %v1549 = vpop.f32.mrf.mxu0
  %v1550 = vpop.f32.mrf.mxu0
  %v1551 = vpop.f32.mrf.mxu0
  %1552 = vdwg.mxu0
  %v1553 = vadd.f32 %v1437, %v1548
  %s1554 = scalar_lea.vmem %s3, 576
  %v1555 = vld [vmem:[%s1554] sm:$0xf]
  %v1556 = vld [vmem:[%s1554 + $0x4] sm:$0xf]
  %v1557 = vld [vmem:[%s1554 + $0x8] sm:$0xf]
  %v1558 = vld [vmem:[%s1554 + $0xc] sm:$0xf]
  %v1559 = vld [vmem:[%s1554 + $0x10] sm:$0xf]
  %v1560 = vld [vmem:[%s1554 + $0x14] sm:$0xf]
  %v1561 = vld [vmem:[%s1554 + $0x18] sm:$0xf]
  %v1562 = vld [vmem:[%s1554 + $0x1c] sm:$0xf]
  %v1563 = vld [vmem:[%s1554 + $0x20] sm:$0xf]
  %v1564 = vld [vmem:[%s1554 + $0x24] sm:$0xf]
  %v1565 = vld [vmem:[%s1554 + $0x28] sm:$0xf]
  %v1566 = vld [vmem:[%s1554 + $0x2c] sm:$0xf]
  %v1567 = vld [vmem:[%s1554 + $0x30] sm:$0xf]
  %v1568 = vld [vmem:[%s1554 + $0x34] sm:$0xf]
  %v1569 = vld [vmem:[%s1554 + $0x38] sm:$0xf]
  %v1570 = vld [vmem:[%s1554 + $0x3c] sm:$0xf]
  %v1571 = vrot.slane %v1459, 1
  %v1572 = vsel %vm588, %v1460, %v1571
  %v1573 = vpack.c.b16 %v1572, %v1572
  %v1591 = vunpack.c.l.b16 %v1555
  %v1592 = vunpack.c.l.b16 %v1556
  %v1593 = vunpack.c.l.b16 %v1557
  %v1594 = vunpack.c.l.b16 %v1558
  %v1595 = vunpack.c.l.b16 %v1559
  %v1596 = vunpack.c.l.b16 %v1560
  %v1597 = vunpack.c.l.b16 %v1561
  %v1598 = vunpack.c.l.b16 %v1562
  %v1599 = vunpack.c.l.b16 %v1563
  %v1600 = vunpack.c.l.b16 %v1564
  %v1601 = vunpack.c.l.b16 %v1565
  %v1602 = vunpack.c.l.b16 %v1566
  %v1603 = vunpack.c.l.b16 %v1567
  %v1604 = vunpack.c.l.b16 %v1568
  %v1605 = vunpack.c.l.b16 %v1569
  %v1606 = vunpack.c.l.b16 %v1570
  %v1607 = vpack.c.b16 %v1592, %v1591
  %v1608 = vpack.c.b16 %v1594, %v1593
  %v1609 = vpack.c.b16 %v1596, %v1595
  %v1610 = vpack.c.b16 %v1598, %v1597
  %v1611 = vpack.c.b16 %v1600, %v1599
  %v1612 = vpack.c.b16 %v1602, %v1601
  %v1613 = vpack.c.b16 %v1604, %v1603
  %v1614 = vpack.c.b16 %v1606, %v1605
  %1623 = vmatprep.subr.bf16.mxu0 0
  %1624 = vmatpush1.bf16.msra.mxu0 %v1614
  %1625 = vmatprep.subr.bf16.mxu0 0
  %1626 = vmatpush1.bf16.msra.mxu0 %v1613
  %1627 = vmatprep.subr.bf16.mxu0 0
  %1628 = vmatpush1.bf16.msra.mxu0 %v1612
  %1629 = vmatprep.subr.bf16.mxu0 0
  %1630 = vmatpush1.bf16.msra.mxu0 %v1611
  %1631 = vmatprep.subr.bf16.mxu0 0
  %1632 = vmatpush1.bf16.msra.mxu0 %v1610
  %1633 = vmatprep.subr.bf16.mxu0 0
  %1634 = vmatpush1.bf16.msra.mxu0 %v1609
  %1635 = vmatprep.subr.bf16.mxu0 0
  %1636 = vmatpush1.bf16.msra.mxu0 %v1608
  %1637 = vmatprep.subr.bf16.mxu0 0
  %1638 = vmatpush1.bf16.msra.mxu0 %v1607
  %1639 = vmatprep.subr.bf16.mxu0 0
  %1640 = vmatpush2.bf16.msra.mxu0 0
  %1641 = vmatprep.subr.bf16.mxu0 0
  %1642 = vmatpush2.bf16.msra.mxu0 0
  %1643 = vmatprep.subr.bf16.mxu0 0
  %1644 = vmatpush2.bf16.msra.mxu0 0
  %1645 = vmatprep.subr.bf16.mxu0 0
  %1646 = vmatpush2.bf16.msra.mxu0 0
  %1647 = vmatprep.subr.bf16.mxu0 0
  %1648 = vmatpush2.bf16.msra.mxu0 0
  %1649 = vmatprep.subr.bf16.mxu0 0
  %1650 = vmatpush2.bf16.msra.mxu0 0
  %1651 = vmatprep.subr.bf16.mxu0 0
  %1652 = vmatpush2.bf16.msra.mxu0 0
  %1653 = vmatprep.subr.bf16.mxu0 0
  %1654 = vmatpush2.bf16.msra.mxu0 0
  %1655 = vmatprep.mubr.bf16.mxu0 0
  %1656 = vmatmul.mubr.bf16.gmra.mxu0 %v1573
  %v1657 = vpop.f32.mrf.mxu0
  %v1658 = vadd.f32 0.0, %v1657
  %v1659 = vpop.f32.mrf.mxu0
  %v1660 = vpop.f32.mrf.mxu0
  %v1661 = vpop.f32.mrf.mxu0
  %1662 = vdwg.mxu0
  %v1663 = vadd.f32 %v1553, %v1658
  %s1664 = scalar_lea.vmem %s3, 640
  %v1665 = vld [vmem:[%s1664] sm:$0xf]
  %v1666 = vld [vmem:[%s1664 + $0x4] sm:$0xf]
  %v1667 = vld [vmem:[%s1664 + $0x8] sm:$0xf]
  %v1668 = vld [vmem:[%s1664 + $0xc] sm:$0xf]
  %v1669 = vld [vmem:[%s1664 + $0x10] sm:$0xf]
  %v1670 = vld [vmem:[%s1664 + $0x14] sm:$0xf]
  %v1671 = vld [vmem:[%s1664 + $0x18] sm:$0xf]
  %v1672 = vld [vmem:[%s1664 + $0x1c] sm:$0xf]
  %v1673 = vld [vmem:[%s1664 + $0x20] sm:$0xf]
  %v1674 = vld [vmem:[%s1664 + $0x24] sm:$0xf]
  %v1675 = vld [vmem:[%s1664 + $0x28] sm:$0xf]
  %v1676 = vld [vmem:[%s1664 + $0x2c] sm:$0xf]
  %v1677 = vld [vmem:[%s1664 + $0x30] sm:$0xf]
  %v1678 = vld [vmem:[%s1664 + $0x34] sm:$0xf]
  %v1679 = vld [vmem:[%s1664 + $0x38] sm:$0xf]
  %v1680 = vld [vmem:[%s1664 + $0x3c] sm:$0xf]
  %v1681 = vrot.slane %v1459, 2
  %v1682 = vrot.slane %v1460, 1
  %v1683 = vsel %vm588, %v1682, %v1681
  %v1684 = vpack.c.b16 %v1683, %v1683
  %v1702 = vunpack.c.l.b16 %v1665
  %v1703 = vunpack.c.l.b16 %v1666
  %v1704 = vunpack.c.l.b16 %v1667
  %v1705 = vunpack.c.l.b16 %v1668
  %v1706 = vunpack.c.l.b16 %v1669
  %v1707 = vunpack.c.l.b16 %v1670
  %v1708 = vunpack.c.l.b16 %v1671
  %v1709 = vunpack.c.l.b16 %v1672
  %v1710 = vunpack.c.l.b16 %v1673
  %v1711 = vunpack.c.l.b16 %v1674
  %v1712 = vunpack.c.l.b16 %v1675
  %v1713 = vunpack.c.l.b16 %v1676
  %v1714 = vunpack.c.l.b16 %v1677
  %v1715 = vunpack.c.l.b16 %v1678
  %v1716 = vunpack.c.l.b16 %v1679
  %v1717 = vunpack.c.l.b16 %v1680
  %v1718 = vpack.c.b16 %v1703, %v1702
  %v1719 = vpack.c.b16 %v1705, %v1704
  %v1720 = vpack.c.b16 %v1707, %v1706
  %v1721 = vpack.c.b16 %v1709, %v1708
  %v1722 = vpack.c.b16 %v1711, %v1710
  %v1723 = vpack.c.b16 %v1713, %v1712
  %v1724 = vpack.c.b16 %v1715, %v1714
  %v1725 = vpack.c.b16 %v1717, %v1716
  %1734 = vmatprep.subr.bf16.mxu0 0
  %1735 = vmatpush1.bf16.msra.mxu0 %v1725
  %1736 = vmatprep.subr.bf16.mxu0 0
  %1737 = vmatpush1.bf16.msra.mxu0 %v1724
  %1738 = vmatprep.subr.bf16.mxu0 0
  %1739 = vmatpush1.bf16.msra.mxu0 %v1723
  %1740 = vmatprep.subr.bf16.mxu0 0
  %1741 = vmatpush1.bf16.msra.mxu0 %v1722
  %1742 = vmatprep.subr.bf16.mxu0 0
  %1743 = vmatpush1.bf16.msra.mxu0 %v1721
  %1744 = vmatprep.subr.bf16.mxu0 0
  %1745 = vmatpush1.bf16.msra.mxu0 %v1720
  %1746 = vmatprep.subr.bf16.mxu0 0
  %1747 = vmatpush1.bf16.msra.mxu0 %v1719
  %1748 = vmatprep.subr.bf16.mxu0 0
  %1749 = vmatpush1.bf16.msra.mxu0 %v1718
  %1750 = vmatprep.subr.bf16.mxu0 0
  %1751 = vmatpush2.bf16.msra.mxu0 0
  %1752 = vmatprep.subr.bf16.mxu0 0
  %1753 = vmatpush2.bf16.msra.mxu0 0
  %1754 = vmatprep.subr.bf16.mxu0 0
  %1755 = vmatpush2.bf16.msra.mxu0 0
  %1756 = vmatprep.subr.bf16.mxu0 0
  %1757 = vmatpush2.bf16.msra.mxu0 0
  %1758 = vmatprep.subr.bf16.mxu0 0
  %1759 = vmatpush2.bf16.msra.mxu0 0
  %1760 = vmatprep.subr.bf16.mxu0 0
  %1761 = vmatpush2.bf16.msra.mxu0 0
  %1762 = vmatprep.subr.bf16.mxu0 0
  %1763 = vmatpush2.bf16.msra.mxu0 0
  %1764 = vmatprep.subr.bf16.mxu0 0
  %1765 = vmatpush2.bf16.msra.mxu0 0
  %1766 = vmatprep.mubr.bf16.mxu0 0
  %1767 = vmatmul.mubr.bf16.gmra.mxu0 %v1684
  %v1768 = vpop.f32.mrf.mxu0
  %v1769 = vadd.f32 0.0, %v1768
  %v1770 = vpop.f32.mrf.mxu0
  %v1771 = vpop.f32.mrf.mxu0
  %v1772 = vpop.f32.mrf.mxu0
  %1773 = vdwg.mxu0
  %v1774 = vadd.f32 %v1663, %v1769
  %s1775 = scalar_lea.vmem %s3, 704
  %v1776 = vld [vmem:[%s1775] sm:$0xf]
  %v1777 = vld [vmem:[%s1775 + $0x4] sm:$0xf]
  %v1778 = vld [vmem:[%s1775 + $0x8] sm:$0xf]
  %v1779 = vld [vmem:[%s1775 + $0xc] sm:$0xf]
  %v1780 = vld [vmem:[%s1775 + $0x10] sm:$0xf]
  %v1781 = vld [vmem:[%s1775 + $0x14] sm:$0xf]
  %v1782 = vld [vmem:[%s1775 + $0x18] sm:$0xf]
  %v1783 = vld [vmem:[%s1775 + $0x1c] sm:$0xf]
  %v1784 = vld [vmem:[%s1775 + $0x20] sm:$0xf]
  %v1785 = vld [vmem:[%s1775 + $0x24] sm:$0xf]
  %v1786 = vld [vmem:[%s1775 + $0x28] sm:$0xf]
  %v1787 = vld [vmem:[%s1775 + $0x2c] sm:$0xf]
  %v1788 = vld [vmem:[%s1775 + $0x30] sm:$0xf]
  %v1789 = vld [vmem:[%s1775 + $0x34] sm:$0xf]
  %v1790 = vld [vmem:[%s1775 + $0x38] sm:$0xf]
  %v1791 = vld [vmem:[%s1775 + $0x3c] sm:$0xf]
  %v1792 = vrot.slane %v1459, 3
  %v1793 = vrot.slane %v1460, 2
  %v1794 = vsel %vm588, %v1793, %v1792
  %v1795 = vpack.c.b16 %v1794, %v1794
  %v1813 = vunpack.c.l.b16 %v1776
  %v1814 = vunpack.c.l.b16 %v1777
  %v1815 = vunpack.c.l.b16 %v1778
  %v1816 = vunpack.c.l.b16 %v1779
  %v1817 = vunpack.c.l.b16 %v1780
  %v1818 = vunpack.c.l.b16 %v1781
  %v1819 = vunpack.c.l.b16 %v1782
  %v1820 = vunpack.c.l.b16 %v1783
  %v1821 = vunpack.c.l.b16 %v1784
  %v1822 = vunpack.c.l.b16 %v1785
  %v1823 = vunpack.c.l.b16 %v1786
  %v1824 = vunpack.c.l.b16 %v1787
  %v1825 = vunpack.c.l.b16 %v1788
  %v1826 = vunpack.c.l.b16 %v1789
  %v1827 = vunpack.c.l.b16 %v1790
  %v1828 = vunpack.c.l.b16 %v1791
  %v1829 = vpack.c.b16 %v1814, %v1813
  %v1830 = vpack.c.b16 %v1816, %v1815
  %v1831 = vpack.c.b16 %v1818, %v1817
  %v1832 = vpack.c.b16 %v1820, %v1819
  %v1833 = vpack.c.b16 %v1822, %v1821
  %v1834 = vpack.c.b16 %v1824, %v1823
  %v1835 = vpack.c.b16 %v1826, %v1825
  %v1836 = vpack.c.b16 %v1828, %v1827
  %1845 = vmatprep.subr.bf16.mxu0 0
  %1846 = vmatpush1.bf16.msra.mxu0 %v1836
  %1847 = vmatprep.subr.bf16.mxu0 0
  %1848 = vmatpush1.bf16.msra.mxu0 %v1835
  %1849 = vmatprep.subr.bf16.mxu0 0
  %1850 = vmatpush1.bf16.msra.mxu0 %v1834
  %1851 = vmatprep.subr.bf16.mxu0 0
  %1852 = vmatpush1.bf16.msra.mxu0 %v1833
  %1853 = vmatprep.subr.bf16.mxu0 0
  %1854 = vmatpush1.bf16.msra.mxu0 %v1832
  %1855 = vmatprep.subr.bf16.mxu0 0
  %1856 = vmatpush1.bf16.msra.mxu0 %v1831
  %1857 = vmatprep.subr.bf16.mxu0 0
  %1858 = vmatpush1.bf16.msra.mxu0 %v1830
  %1859 = vmatprep.subr.bf16.mxu0 0
  %1860 = vmatpush1.bf16.msra.mxu0 %v1829
  %1861 = vmatprep.subr.bf16.mxu0 0
  %1862 = vmatpush2.bf16.msra.mxu0 0
  %1863 = vmatprep.subr.bf16.mxu0 0
  %1864 = vmatpush2.bf16.msra.mxu0 0
  %1865 = vmatprep.subr.bf16.mxu0 0
  %1866 = vmatpush2.bf16.msra.mxu0 0
  %1867 = vmatprep.subr.bf16.mxu0 0
  %1868 = vmatpush2.bf16.msra.mxu0 0
  %1869 = vmatprep.subr.bf16.mxu0 0
  %1870 = vmatpush2.bf16.msra.mxu0 0
  %1871 = vmatprep.subr.bf16.mxu0 0
  %1872 = vmatpush2.bf16.msra.mxu0 0
  %1873 = vmatprep.subr.bf16.mxu0 0
  %1874 = vmatpush2.bf16.msra.mxu0 0
  %1875 = vmatprep.subr.bf16.mxu0 0
  %1876 = vmatpush2.bf16.msra.mxu0 0
  %1877 = vmatprep.mubr.bf16.mxu0 0
  %1878 = vmatmul.mubr.bf16.gmra.mxu0 %v1795
  %v1879 = vpop.f32.mrf.mxu0
  %v1880 = vadd.f32 0.0, %v1879
  %v1881 = vpop.f32.mrf.mxu0
  %v1882 = vpop.f32.mrf.mxu0
  %v1883 = vpop.f32.mrf.mxu0
  %1884 = vdwg.mxu0
  %v1885 = vadd.f32 %v1774, %v1880
  %s1886 = scalar_lea.vmem %s3, 768
  %v1887 = vld [vmem:[%s1886] sm:$0xf]
  %v1888 = vld [vmem:[%s1886 + $0x4] sm:$0xf]
  %v1889 = vld [vmem:[%s1886 + $0x8] sm:$0xf]
  %v1890 = vld [vmem:[%s1886 + $0xc] sm:$0xf]
  %v1891 = vld [vmem:[%s1886 + $0x10] sm:$0xf]
  %v1892 = vld [vmem:[%s1886 + $0x14] sm:$0xf]
  %v1893 = vld [vmem:[%s1886 + $0x18] sm:$0xf]
  %v1894 = vld [vmem:[%s1886 + $0x1c] sm:$0xf]
  %v1895 = vld [vmem:[%s1886 + $0x20] sm:$0xf]
  %v1896 = vld [vmem:[%s1886 + $0x24] sm:$0xf]
  %v1897 = vld [vmem:[%s1886 + $0x28] sm:$0xf]
  %v1898 = vld [vmem:[%s1886 + $0x2c] sm:$0xf]
  %v1899 = vld [vmem:[%s1886 + $0x30] sm:$0xf]
  %v1900 = vld [vmem:[%s1886 + $0x34] sm:$0xf]
  %v1901 = vld [vmem:[%s1886 + $0x38] sm:$0xf]
  %v1902 = vld [vmem:[%s1886 + $0x3c] sm:$0xf]
  %v1903 = vrot.slane %v1459, 4
  %v1904 = vrot.slane %v1460, 3
  %v1905 = vsel %vm588, %v1904, %v1903
  %v1906 = vpack.c.b16 %v1905, %v1905
  %v1924 = vunpack.c.l.b16 %v1887
  %v1925 = vunpack.c.l.b16 %v1888
  %v1926 = vunpack.c.l.b16 %v1889
  %v1927 = vunpack.c.l.b16 %v1890
  %v1928 = vunpack.c.l.b16 %v1891
  %v1929 = vunpack.c.l.b16 %v1892
  %v1930 = vunpack.c.l.b16 %v1893
  %v1931 = vunpack.c.l.b16 %v1894
  %v1932 = vunpack.c.l.b16 %v1895
  %v1933 = vunpack.c.l.b16 %v1896
  %v1934 = vunpack.c.l.b16 %v1897
  %v1935 = vunpack.c.l.b16 %v1898
  %v1936 = vunpack.c.l.b16 %v1899
  %v1937 = vunpack.c.l.b16 %v1900
  %v1938 = vunpack.c.l.b16 %v1901
  %v1939 = vunpack.c.l.b16 %v1902
  %v1940 = vpack.c.b16 %v1925, %v1924
  %v1941 = vpack.c.b16 %v1927, %v1926
  %v1942 = vpack.c.b16 %v1929, %v1928
  %v1943 = vpack.c.b16 %v1931, %v1930
  %v1944 = vpack.c.b16 %v1933, %v1932
  %v1945 = vpack.c.b16 %v1935, %v1934
  %v1946 = vpack.c.b16 %v1937, %v1936
  %v1947 = vpack.c.b16 %v1939, %v1938
  %1956 = vmatprep.subr.bf16.mxu0 0
  %1957 = vmatpush1.bf16.msra.mxu0 %v1947
  %1958 = vmatprep.subr.bf16.mxu0 0
  %1959 = vmatpush1.bf16.msra.mxu0 %v1946
  %1960 = vmatprep.subr.bf16.mxu0 0
  %1961 = vmatpush1.bf16.msra.mxu0 %v1945
  %1962 = vmatprep.subr.bf16.mxu0 0
  %1963 = vmatpush1.bf16.msra.mxu0 %v1944
  %1964 = vmatprep.subr.bf16.mxu0 0
  %1965 = vmatpush1.bf16.msra.mxu0 %v1943
  %1966 = vmatprep.subr.bf16.mxu0 0
  %1967 = vmatpush1.bf16.msra.mxu0 %v1942
  %1968 = vmatprep.subr.bf16.mxu0 0
  %1969 = vmatpush1.bf16.msra.mxu0 %v1941
  %1970 = vmatprep.subr.bf16.mxu0 0
  %1971 = vmatpush1.bf16.msra.mxu0 %v1940
  %1972 = vmatprep.subr.bf16.mxu0 0
  %1973 = vmatpush2.bf16.msra.mxu0 0
  %1974 = vmatprep.subr.bf16.mxu0 0
  %1975 = vmatpush2.bf16.msra.mxu0 0
  %1976 = vmatprep.subr.bf16.mxu0 0
  %1977 = vmatpush2.bf16.msra.mxu0 0
  %1978 = vmatprep.subr.bf16.mxu0 0
  %1979 = vmatpush2.bf16.msra.mxu0 0
  %1980 = vmatprep.subr.bf16.mxu0 0
  %1981 = vmatpush2.bf16.msra.mxu0 0
  %1982 = vmatprep.subr.bf16.mxu0 0
  %1983 = vmatpush2.bf16.msra.mxu0 0
  %1984 = vmatprep.subr.bf16.mxu0 0
  %1985 = vmatpush2.bf16.msra.mxu0 0
  %1986 = vmatprep.subr.bf16.mxu0 0
  %1987 = vmatpush2.bf16.msra.mxu0 0
  %1988 = vmatprep.mubr.bf16.mxu0 0
  %1989 = vmatmul.mubr.bf16.gmra.mxu0 %v1906
  %v1990 = vpop.f32.mrf.mxu0
  %v1991 = vadd.f32 0.0, %v1990
  %v1992 = vpop.f32.mrf.mxu0
  %v1993 = vpop.f32.mrf.mxu0
  %v1994 = vpop.f32.mrf.mxu0
  %1995 = vdwg.mxu0
  %v1996 = vadd.f32 %v1885, %v1991
  %s1997 = scalar_lea.vmem %s3, 832
  %v1998 = vld [vmem:[%s1997] sm:$0xf]
  %v1999 = vld [vmem:[%s1997 + $0x4] sm:$0xf]
  %v2000 = vld [vmem:[%s1997 + $0x8] sm:$0xf]
  %v2001 = vld [vmem:[%s1997 + $0xc] sm:$0xf]
  %v2002 = vld [vmem:[%s1997 + $0x10] sm:$0xf]
  %v2003 = vld [vmem:[%s1997 + $0x14] sm:$0xf]
  %v2004 = vld [vmem:[%s1997 + $0x18] sm:$0xf]
  %v2005 = vld [vmem:[%s1997 + $0x1c] sm:$0xf]
  %v2006 = vld [vmem:[%s1997 + $0x20] sm:$0xf]
  %v2007 = vld [vmem:[%s1997 + $0x24] sm:$0xf]
  %v2008 = vld [vmem:[%s1997 + $0x28] sm:$0xf]
  %v2009 = vld [vmem:[%s1997 + $0x2c] sm:$0xf]
  %v2010 = vld [vmem:[%s1997 + $0x30] sm:$0xf]
  %v2011 = vld [vmem:[%s1997 + $0x34] sm:$0xf]
  %v2012 = vld [vmem:[%s1997 + $0x38] sm:$0xf]
  %v2013 = vld [vmem:[%s1997 + $0x3c] sm:$0xf]
  %v2014 = vrot.slane %v1459, 5
  %v2015 = vrot.slane %v1460, 4
  %v2016 = vsel %vm588, %v2015, %v2014
  %v2017 = vpack.c.b16 %v2016, %v2016
  %v2035 = vunpack.c.l.b16 %v1998
  %v2036 = vunpack.c.l.b16 %v1999
  %v2037 = vunpack.c.l.b16 %v2000
  %v2038 = vunpack.c.l.b16 %v2001
  %v2039 = vunpack.c.l.b16 %v2002
  %v2040 = vunpack.c.l.b16 %v2003
  %v2041 = vunpack.c.l.b16 %v2004
  %v2042 = vunpack.c.l.b16 %v2005
  %v2043 = vunpack.c.l.b16 %v2006
  %v2044 = vunpack.c.l.b16 %v2007
  %v2045 = vunpack.c.l.b16 %v2008
  %v2046 = vunpack.c.l.b16 %v2009
  %v2047 = vunpack.c.l.b16 %v2010
  %v2048 = vunpack.c.l.b16 %v2011
  %v2049 = vunpack.c.l.b16 %v2012
  %v2050 = vunpack.c.l.b16 %v2013
  %v2051 = vpack.c.b16 %v2036, %v2035
  %v2052 = vpack.c.b16 %v2038, %v2037
  %v2053 = vpack.c.b16 %v2040, %v2039
  %v2054 = vpack.c.b16 %v2042, %v2041
  %v2055 = vpack.c.b16 %v2044, %v2043
  %v2056 = vpack.c.b16 %v2046, %v2045
  %v2057 = vpack.c.b16 %v2048, %v2047
  %v2058 = vpack.c.b16 %v2050, %v2049
  %2067 = vmatprep.subr.bf16.mxu0 0
  %2068 = vmatpush1.bf16.msra.mxu0 %v2058
  %2069 = vmatprep.subr.bf16.mxu0 0
  %2070 = vmatpush1.bf16.msra.mxu0 %v2057
  %2071 = vmatprep.subr.bf16.mxu0 0
  %2072 = vmatpush1.bf16.msra.mxu0 %v2056
  %2073 = vmatprep.subr.bf16.mxu0 0
  %2074 = vmatpush1.bf16.msra.mxu0 %v2055
  %2075 = vmatprep.subr.bf16.mxu0 0
  %2076 = vmatpush1.bf16.msra.mxu0 %v2054
  %2077 = vmatprep.subr.bf16.mxu0 0
  %2078 = vmatpush1.bf16.msra.mxu0 %v2053
  %2079 = vmatprep.subr.bf16.mxu0 0
  %2080 = vmatpush1.bf16.msra.mxu0 %v2052
  %2081 = vmatprep.subr.bf16.mxu0 0
  %2082 = vmatpush1.bf16.msra.mxu0 %v2051
  %2083 = vmatprep.subr.bf16.mxu0 0
  %2084 = vmatpush2.bf16.msra.mxu0 0
  %2085 = vmatprep.subr.bf16.mxu0 0
  %2086 = vmatpush2.bf16.msra.mxu0 0
  %2087 = vmatprep.subr.bf16.mxu0 0
  %2088 = vmatpush2.bf16.msra.mxu0 0
  %2089 = vmatprep.subr.bf16.mxu0 0
  %2090 = vmatpush2.bf16.msra.mxu0 0
  %2091 = vmatprep.subr.bf16.mxu0 0
  %2092 = vmatpush2.bf16.msra.mxu0 0
  %2093 = vmatprep.subr.bf16.mxu0 0
  %2094 = vmatpush2.bf16.msra.mxu0 0
  %2095 = vmatprep.subr.bf16.mxu0 0
  %2096 = vmatpush2.bf16.msra.mxu0 0
  %2097 = vmatprep.subr.bf16.mxu0 0
  %2098 = vmatpush2.bf16.msra.mxu0 0
  %2099 = vmatprep.mubr.bf16.mxu0 0
  %2100 = vmatmul.mubr.bf16.gmra.mxu0 %v2017
  %v2101 = vpop.f32.mrf.mxu0
  %v2102 = vadd.f32 0.0, %v2101
  %v2103 = vpop.f32.mrf.mxu0
  %v2104 = vpop.f32.mrf.mxu0
  %v2105 = vpop.f32.mrf.mxu0
  %2106 = vdwg.mxu0
  %v2107 = vadd.f32 %v1996, %v2102
  %s2108 = scalar_lea.vmem %s3, 896
  %v2109 = vld [vmem:[%s2108] sm:$0xf]
  %v2110 = vld [vmem:[%s2108 + $0x4] sm:$0xf]
  %v2111 = vld [vmem:[%s2108 + $0x8] sm:$0xf]
  %v2112 = vld [vmem:[%s2108 + $0xc] sm:$0xf]
  %v2113 = vld [vmem:[%s2108 + $0x10] sm:$0xf]
  %v2114 = vld [vmem:[%s2108 + $0x14] sm:$0xf]
  %v2115 = vld [vmem:[%s2108 + $0x18] sm:$0xf]
  %v2116 = vld [vmem:[%s2108 + $0x1c] sm:$0xf]
  %v2117 = vld [vmem:[%s2108 + $0x20] sm:$0xf]
  %v2118 = vld [vmem:[%s2108 + $0x24] sm:$0xf]
  %v2119 = vld [vmem:[%s2108 + $0x28] sm:$0xf]
  %v2120 = vld [vmem:[%s2108 + $0x2c] sm:$0xf]
  %v2121 = vld [vmem:[%s2108 + $0x30] sm:$0xf]
  %v2122 = vld [vmem:[%s2108 + $0x34] sm:$0xf]
  %v2123 = vld [vmem:[%s2108 + $0x38] sm:$0xf]
  %v2124 = vld [vmem:[%s2108 + $0x3c] sm:$0xf]
  %v2125 = vrot.slane %v1459, 6
  %v2126 = vrot.slane %v1460, 5
  %v2127 = vsel %vm588, %v2126, %v2125
  %v2128 = vpack.c.b16 %v2127, %v2127
  %v2146 = vunpack.c.l.b16 %v2109
  %v2147 = vunpack.c.l.b16 %v2110
  %v2148 = vunpack.c.l.b16 %v2111
  %v2149 = vunpack.c.l.b16 %v2112
  %v2150 = vunpack.c.l.b16 %v2113
  %v2151 = vunpack.c.l.b16 %v2114
  %v2152 = vunpack.c.l.b16 %v2115
  %v2153 = vunpack.c.l.b16 %v2116
  %v2154 = vunpack.c.l.b16 %v2117
  %v2155 = vunpack.c.l.b16 %v2118
  %v2156 = vunpack.c.l.b16 %v2119
  %v2157 = vunpack.c.l.b16 %v2120
  %v2158 = vunpack.c.l.b16 %v2121
  %v2159 = vunpack.c.l.b16 %v2122
  %v2160 = vunpack.c.l.b16 %v2123
  %v2161 = vunpack.c.l.b16 %v2124
  %v2162 = vpack.c.b16 %v2147, %v2146
  %v2163 = vpack.c.b16 %v2149, %v2148
  %v2164 = vpack.c.b16 %v2151, %v2150
  %v2165 = vpack.c.b16 %v2153, %v2152
  %v2166 = vpack.c.b16 %v2155, %v2154
  %v2167 = vpack.c.b16 %v2157, %v2156
  %v2168 = vpack.c.b16 %v2159, %v2158
  %v2169 = vpack.c.b16 %v2161, %v2160
  %2178 = vmatprep.subr.bf16.mxu0 0
  %2179 = vmatpush1.bf16.msra.mxu0 %v2169
  %2180 = vmatprep.subr.bf16.mxu0 0
  %2181 = vmatpush1.bf16.msra.mxu0 %v2168
  %2182 = vmatprep.subr.bf16.mxu0 0
  %2183 = vmatpush1.bf16.msra.mxu0 %v2167
  %2184 = vmatprep.subr.bf16.mxu0 0
  %2185 = vmatpush1.bf16.msra.mxu0 %v2166
  %2186 = vmatprep.subr.bf16.mxu0 0
  %2187 = vmatpush1.bf16.msra.mxu0 %v2165
  %2188 = vmatprep.subr.bf16.mxu0 0
  %2189 = vmatpush1.bf16.msra.mxu0 %v2164
  %2190 = vmatprep.subr.bf16.mxu0 0
  %2191 = vmatpush1.bf16.msra.mxu0 %v2163
  %2192 = vmatprep.subr.bf16.mxu0 0
  %2193 = vmatpush1.bf16.msra.mxu0 %v2162
  %2194 = vmatprep.subr.bf16.mxu0 0
  %2195 = vmatpush2.bf16.msra.mxu0 0
  %2196 = vmatprep.subr.bf16.mxu0 0
  %2197 = vmatpush2.bf16.msra.mxu0 0
  %2198 = vmatprep.subr.bf16.mxu0 0
  %2199 = vmatpush2.bf16.msra.mxu0 0
  %2200 = vmatprep.subr.bf16.mxu0 0
  %2201 = vmatpush2.bf16.msra.mxu0 0
  %2202 = vmatprep.subr.bf16.mxu0 0
  %2203 = vmatpush2.bf16.msra.mxu0 0
  %2204 = vmatprep.subr.bf16.mxu0 0
  %2205 = vmatpush2.bf16.msra.mxu0 0
  %2206 = vmatprep.subr.bf16.mxu0 0
  %2207 = vmatpush2.bf16.msra.mxu0 0
  %2208 = vmatprep.subr.bf16.mxu0 0
  %2209 = vmatpush2.bf16.msra.mxu0 0
  %2210 = vmatprep.mubr.bf16.mxu0 0
  %2211 = vmatmul.mubr.bf16.gmra.mxu0 %v2128
  %v2212 = vpop.f32.mrf.mxu0
  %v2213 = vadd.f32 0.0, %v2212
  %v2214 = vpop.f32.mrf.mxu0
  %v2215 = vpop.f32.mrf.mxu0
  %v2216 = vpop.f32.mrf.mxu0
  %2217 = vdwg.mxu0
  %v2218 = vadd.f32 %v2107, %v2213
  %s2219 = scalar_lea.vmem %s3, 960
  %v2220 = vld [vmem:[%s2219] sm:$0xf]
  %v2221 = vld [vmem:[%s2219 + $0x4] sm:$0xf]
  %v2222 = vld [vmem:[%s2219 + $0x8] sm:$0xf]
  %v2223 = vld [vmem:[%s2219 + $0xc] sm:$0xf]
  %v2224 = vld [vmem:[%s2219 + $0x10] sm:$0xf]
  %v2225 = vld [vmem:[%s2219 + $0x14] sm:$0xf]
  %v2226 = vld [vmem:[%s2219 + $0x18] sm:$0xf]
  %v2227 = vld [vmem:[%s2219 + $0x1c] sm:$0xf]
  %v2228 = vld [vmem:[%s2219 + $0x20] sm:$0xf]
  %v2229 = vld [vmem:[%s2219 + $0x24] sm:$0xf]
  %v2230 = vld [vmem:[%s2219 + $0x28] sm:$0xf]
  %v2231 = vld [vmem:[%s2219 + $0x2c] sm:$0xf]
  %v2232 = vld [vmem:[%s2219 + $0x30] sm:$0xf]
  %v2233 = vld [vmem:[%s2219 + $0x34] sm:$0xf]
  %v2234 = vld [vmem:[%s2219 + $0x38] sm:$0xf]
  %v2235 = vld [vmem:[%s2219 + $0x3c] sm:$0xf]
  %v2236 = vrot.slane %v1459, 7
  %v2237 = vrot.slane %v1460, 6
  %v2238 = vsel %vm588, %v2237, %v2236
  %v2239 = vpack.c.b16 %v2238, %v2238
  %v2257 = vunpack.c.l.b16 %v2220
  %v2258 = vunpack.c.l.b16 %v2221
  %v2259 = vunpack.c.l.b16 %v2222
  %v2260 = vunpack.c.l.b16 %v2223
  %v2261 = vunpack.c.l.b16 %v2224
  %v2262 = vunpack.c.l.b16 %v2225
  %v2263 = vunpack.c.l.b16 %v2226
  %v2264 = vunpack.c.l.b16 %v2227
  %v2265 = vunpack.c.l.b16 %v2228
  %v2266 = vunpack.c.l.b16 %v2229
  %v2267 = vunpack.c.l.b16 %v2230
  %v2268 = vunpack.c.l.b16 %v2231
  %v2269 = vunpack.c.l.b16 %v2232
  %v2270 = vunpack.c.l.b16 %v2233
  %v2271 = vunpack.c.l.b16 %v2234
  %v2272 = vunpack.c.l.b16 %v2235
  %v2273 = vpack.c.b16 %v2258, %v2257
  %v2274 = vpack.c.b16 %v2260, %v2259
  %v2275 = vpack.c.b16 %v2262, %v2261
  %v2276 = vpack.c.b16 %v2264, %v2263
  %v2277 = vpack.c.b16 %v2266, %v2265
  %v2278 = vpack.c.b16 %v2268, %v2267
  %v2279 = vpack.c.b16 %v2270, %v2269
  %v2280 = vpack.c.b16 %v2272, %v2271
  %2289 = vmatprep.subr.bf16.mxu0 0
  %2290 = vmatpush1.bf16.msra.mxu0 %v2280
  %2291 = vmatprep.subr.bf16.mxu0 0
  %2292 = vmatpush1.bf16.msra.mxu0 %v2279
  %2293 = vmatprep.subr.bf16.mxu0 0
  %2294 = vmatpush1.bf16.msra.mxu0 %v2278
  %2295 = vmatprep.subr.bf16.mxu0 0
  %2296 = vmatpush1.bf16.msra.mxu0 %v2277
  %2297 = vmatprep.subr.bf16.mxu0 0
  %2298 = vmatpush1.bf16.msra.mxu0 %v2276
  %2299 = vmatprep.subr.bf16.mxu0 0
  %2300 = vmatpush1.bf16.msra.mxu0 %v2275
  %2301 = vmatprep.subr.bf16.mxu0 0
  %2302 = vmatpush1.bf16.msra.mxu0 %v2274
  %2303 = vmatprep.subr.bf16.mxu0 0
  %2304 = vmatpush1.bf16.msra.mxu0 %v2273
  %2305 = vmatprep.subr.bf16.mxu0 0
  %2306 = vmatpush2.bf16.msra.mxu0 0
  %2307 = vmatprep.subr.bf16.mxu0 0
  %2308 = vmatpush2.bf16.msra.mxu0 0
  %2309 = vmatprep.subr.bf16.mxu0 0
  %2310 = vmatpush2.bf16.msra.mxu0 0
  %2311 = vmatprep.subr.bf16.mxu0 0
  %2312 = vmatpush2.bf16.msra.mxu0 0
  %2313 = vmatprep.subr.bf16.mxu0 0
  %2314 = vmatpush2.bf16.msra.mxu0 0
  %2315 = vmatprep.subr.bf16.mxu0 0
  %2316 = vmatpush2.bf16.msra.mxu0 0
  %2317 = vmatprep.subr.bf16.mxu0 0
  %2318 = vmatpush2.bf16.msra.mxu0 0
  %2319 = vmatprep.subr.bf16.mxu0 0
  %2320 = vmatpush2.bf16.msra.mxu0 0
  %2321 = vmatprep.mubr.bf16.mxu0 0
  %2322 = vmatmul.mubr.bf16.gmra.mxu0 %v2239
  %v2323 = vpop.f32.mrf.mxu0
  %v2324 = vadd.f32 0.0, %v2323
  %v2325 = vpop.f32.mrf.mxu0
  %v2326 = vpop.f32.mrf.mxu0
  %v2327 = vpop.f32.mrf.mxu0
  %2328 = vdwg.mxu0
  %v2329 = vadd.f32 %v2218, %v2324
  %v2330 = vld [vmem:[%s4] sm:$0x1]
  %v2332 = vlaneseq
  %v2333 = vshrl.u32 %v2332, 7
  %v2334 = vsub.s32 0, %v2333
  %v2335 = vrot.slane %v2330, %v2334
  %v2337 = vadd.f32 %v2329, %v2335
  %v2338 = vmax.f32 %v2337, 0.0
  %v2339 = vld [vmem:[%s7] sm:$0x3]
  %v2340 = vld [vmem:[%s8] sm:$0x3]
  %2342 = vrot.lane.b32.xlu0 %v2339, 32
  %v2343 = vpop.permute.xlu0 %2342
  %vm2345 = vcmask 261120
  %v2346 = vsel %vm2345, %v2338, %v2343
  %v2347 = vpack.c.bf16 %v2346, %v2346
  %v2348 = vld [vmem:[%s5] sm:$0xf]
  %v2349 = vld [vmem:[%s5 + $0x4] sm:$0xf]
  %v2350 = vld [vmem:[%s5 + $0x8] sm:$0xf]
  %v2351 = vld [vmem:[%s5 + $0xc] sm:$0xf]
  %v2352 = vld [vmem:[%s5 + $0x10] sm:$0xf]
  %v2353 = vld [vmem:[%s5 + $0x14] sm:$0xf]
  %v2354 = vld [vmem:[%s5 + $0x18] sm:$0xf]
  %v2355 = vld [vmem:[%s5 + $0x1c] sm:$0xf]
  %v2356 = vld [vmem:[%s6] sm:$0x1]
  %v2358 = vlaneseq
  %v2359 = vshrl.u32 %v2358, 7
  %v2360 = vsub.s32 0, %v2359
  %v2361 = vrot.slane %v2356, %v2360
  %v2371 = vunpack.c.l.b16 %v2348
  %v2372 = vunpack.c.l.b16 %v2349
  %v2373 = vunpack.c.l.b16 %v2350
  %v2374 = vunpack.c.l.b16 %v2351
  %v2375 = vunpack.c.l.b16 %v2352
  %v2376 = vunpack.c.l.b16 %v2353
  %v2377 = vunpack.c.l.b16 %v2354
  %v2378 = vunpack.c.l.b16 %v2355
  %v2379 = vpack.c.b16 %v2372, %v2371
  %v2380 = vpack.c.b16 %v2374, %v2373
  %v2381 = vpack.c.b16 %v2376, %v2375
  %v2382 = vpack.c.b16 %v2378, %v2377
  %v2388 = vsel %vm390, %v2347, 0
  %2390 = vmatprep.subr.bf16.mxu0 0
  %2391 = vmatpush1.bf16.msra.mxu0 0
  %2392 = vmatprep.subr.bf16.mxu0 0
  %2393 = vmatpush1.bf16.msra.mxu0 0
  %2394 = vmatprep.subr.bf16.mxu0 0
  %2395 = vmatpush1.bf16.msra.mxu0 0
  %2396 = vmatprep.subr.bf16.mxu0 0
  %2397 = vmatpush1.bf16.msra.mxu0 0
  %2398 = vmatprep.subr.bf16.mxu0 0
  %2399 = vmatpush1.bf16.msra.mxu0 %v2382
  %2400 = vmatprep.subr.bf16.mxu0 0
  %2401 = vmatpush1.bf16.msra.mxu0 %v2381
  %2402 = vmatprep.subr.bf16.mxu0 0
  %2403 = vmatpush1.bf16.msra.mxu0 %v2380
  %2404 = vmatprep.subr.bf16.mxu0 0
  %2405 = vmatpush1.bf16.msra.mxu0 %v2379
  %2406 = vmatprep.subr.bf16.mxu0 0
  %2407 = vmatpush2.bf16.msra.mxu0 0
  %2408 = vmatprep.subr.bf16.mxu0 0
  %2409 = vmatpush2.bf16.msra.mxu0 0
  %2410 = vmatprep.subr.bf16.mxu0 0
  %2411 = vmatpush2.bf16.msra.mxu0 0
  %2412 = vmatprep.subr.bf16.mxu0 0
  %2413 = vmatpush2.bf16.msra.mxu0 0
  %2414 = vmatprep.subr.bf16.mxu0 0
  %2415 = vmatpush2.bf16.msra.mxu0 0
  %2416 = vmatprep.subr.bf16.mxu0 0
  %2417 = vmatpush2.bf16.msra.mxu0 0
  %2418 = vmatprep.subr.bf16.mxu0 0
  %2419 = vmatpush2.bf16.msra.mxu0 0
  %2420 = vmatprep.subr.bf16.mxu0 0
  %2421 = vmatpush2.bf16.msra.mxu0 0
  %2422 = vmatprep.mubr.bf16.mxu0 0
  %2423 = vmatmul.mubr.bf16.gmra.mxu0 %v2388
  %v2424 = vpop.f32.mrf.mxu0
  %v2425 = vadd.f32 %v2361, %v2424
  %v2426 = vpop.f32.mrf.mxu0
  %v2427 = vpop.f32.mrf.mxu0
  %v2428 = vpop.f32.mrf.mxu0
  %2429 = vdwg.mxu0
  %v2430 = vsub.f32 0.0, %v2425
  %v2431 = vmul.f32 %v2430, 1.442695
  %v2432 = vpow.pop %v2431
  %v2433 = vadd.f32 %v2432, 1.0
  %v2434 = vrcp.pop %v2433
  %v2435 = vmul.f32 1.0, %v2434
  %v2436 = vtanh.pop %v2425
  %2438 = vrot.lane.b32.xlu0 %v2340, 32
  %v2439 = vpop.permute.xlu0 %2438
  %v2441 = vmul.f32 %v2435, %v2439
  %2443 = vrot.lane.b32.xlu0 %v2436, 64
  %v2444 = vpop.permute.xlu0 %2443
  %v2446 = vmul.f32 %v2435, %v2444
  %2448 = vrot.lane.b32.xlu0 %v2446, 32
  %v2449 = vpop.permute.xlu0 %2448
  %v2451 = vadd.f32 %v2441, %v2449
  %v2452 = vtanh.pop %v2451
  %2454 = vrot.lane.b32.xlu0 %v2452, 64
  %v2455 = vpop.permute.xlu0 %2454
  %v2457 = vmul.f32 %v2435, %v2455
  %v2458 = vmax.f32 %v2457, 0.0
  %2460 = vrot.lane.b32.xlu0 %v2458, 32
  %v2461 = vpop.permute.xlu0 %2460
  %2464 = vrot.lane.b32.xlu0 %v2457, 64
  %v2465 = vpop.permute.xlu0 %2464
  %2468 = vrot.lane.b32.xlu0 %v2451, 32
  %v2469 = vpop.permute.xlu0 %2468
  %v2471 = vsel %vm2345, %v2461, %v2465
  %v2472 = vsel %vm390, %v2471, %v2469
  %vm2473 = vcmask 785408
  %v2474 = vsel %vm2473, %v2472, 0.0
  %2475 = vst [vmem:[%s9] sm:$0x3] %v2474
  // Predicated region
  $region38: #{conv_lstm_forward.1} parent=0 // pred_check
    _
  $region39: #{conv_lstm_forward.1} parent=0 // pred_check_branch
    %2477 = sbr.rel (0) target = $region41
  $region40: #{conv_lstm_forward.1} parent=0 // pred_region
    _
  $region41: #{conv_lstm_forward.1} parent=0 // pred_fallthru
    _
  // Predicated region
  $region42: #{conv_lstm_forward.1} parent=0 // pred_check
    _
  $region43: #{conv_lstm_forward.1} parent=0 // pred_check_branch
    %2479 = sbr.rel (0) target = $region45
  $region44: #{conv_lstm_forward.1} parent=0 // pred_region
    _
  $region45: #{conv_lstm_forward.1} parent=0 // pred_fallthru
    _

</llo_original>
